<compile_context>
chip_gen: v7x
topology: tpu7x:2x2x1
jax: 0.10.0
libtpu: 0.0.40
codegen_flags: <defaults>
</compile_context>

<pallas_src>
import math
from functools import partial

import jax
import jax.numpy as jnp
from jax.experimental import pallas as pl
from jax.experimental.pallas import tpu as pltpu

E = 512            # backbone / attention feature width (fixed by the module)
T = 30 + 1         # max_length = 31 position queries
T_PAD = 32         # padded to a full f32 sublane multiple
NUM_CLASS = 4
C_PAD = 128        # lane-dense classifier width (sliced back to NUM_CLASS)
NEG_INF = -1e30    # bias for padded classes -> vanish from log_softmax


# ---------------------------------------------------------------------------
# Fused kernel: per grid step (b, l)
#   1) conv row tile: (TL, K) @ (K, E) + bias -> ReLU -> bf16 into VMEM scratch
#   2) on the last l tile: attention over the full (L, E) scratch, classifier,
#      log_softmax, lane-dense store of (T_PAD, C_PAD).
# ---------------------------------------------------------------------------
def _ronet_fused_kernel(patch_ref, cw_ref, cb_ref, q_ref, wc_ref, bc_ref,
                        o_ref, feat_ref, *, tl):
    l = pl.program_id(1)
    num_l = pl.num_programs(1)

    # --- backbone tile: conv3x3 as im2col matmul (bf16 MXU, f32 acc) ---
    acc = jnp.dot(patch_ref[0], cw_ref[...], preferred_element_type=jnp.float32)
    acc = jnp.maximum(acc + cb_ref[...], 0.0)                  # bias + ReLU
    off = pl.multiple_of(l * tl, tl)
    feat_ref[pl.ds(off, tl), :] = acc.astype(feat_ref.dtype)   # stays in VMEM

    # --- last row tile: attention + classifier + log_softmax, write output ---
    @pl.when(l == num_l - 1)
    def _():
        kv = feat_ref[...]                       # (L, E) bf16, never touches HBM
        q = q_ref[...]                           # (T_PAD, E) bf16, pre-scaled

        # scaled dot-product attention scores over spatial positions (f32 acc)
        scores = jax.lax.dot_general(
            q, kv, (((1,), (1,)), ((), ())),
            preferred_element_type=jnp.float32)                  # (T_PAD, L)

        # softmax over L; divide moved onto the EUP slot
        m = jnp.max(scores, axis=-1, keepdims=True)
        p = jnp.exp(scores - m)
        denom = jnp.sum(p, axis=-1, keepdims=True)
        p = p * pl.reciprocal(denom, approx=True)

        attn_vec = jnp.dot(p.astype(kv.dtype), kv,
                           preferred_element_type=jnp.float32)   # (T_PAD, E)

        # classifier (bf16 operands, f32 acc); padded classes carry -1e30 bias
        logits = jnp.dot(attn_vec.astype(wc_ref.dtype), wc_ref[...],
                         preferred_element_type=jnp.float32) + bc_ref[...]

        # log_softmax over (padded) classes; padded logits contribute exp(.)=0
        lmax = jnp.max(logits, axis=-1, keepdims=True)
        shifted = logits - lmax
        lse = jnp.log(jnp.sum(jnp.exp(shifted), axis=-1, keepdims=True))
        o_ref[0] = shifted - lse


def _pick_l_tile(L):
    """Largest row tile <= 512 that divides L, preferring >= 2 tiles so the
    inner grid axis actually pipelines (and each v7x TC sees >= 2 steps)."""
    best = None
    for cand in (512, 256, 128, 64, 32, 16):
        if L % cand == 0:
            if best is None:
                best = cand
            if L // cand >= 2:
                return cand
    return best if best is not None else L


def ronet_fused(patches, conv_w, conv_b, q, wc, bc, *, L):
    n, _, k_pad = patches.shape
    tl = _pick_l_tile(L)
    num_l = L // tl

    return pl.pallas_call(
        partial(_ronet_fused_kernel, tl=tl),
        out_shape=jax.ShapeDtypeStruct((n, T_PAD, C_PAD), jnp.float32),
        grid=(n, num_l),
        in_specs=[
            pl.BlockSpec((1, tl, k_pad), lambda b, l: (b, l, 0)),   # patches
            pl.BlockSpec((k_pad, E), lambda b, l: (0, 0)),          # conv W
            pl.BlockSpec((1, E), lambda b, l: (0, 0)),              # conv b
            pl.BlockSpec((T_PAD, E), lambda b, l: (0, 0)),          # queries
            pl.BlockSpec((E, C_PAD), lambda b, l: (0, 0)),          # cls W
            pl.BlockSpec((1, C_PAD), lambda b, l: (0, 0)),          # cls b
        ],
        out_specs=pl.BlockSpec((1, T_PAD, C_PAD), lambda b, l: (b, 0, 0)),
        scratch_shapes=[pltpu.VMEM((L, E), jnp.bfloat16)],          # feature map
        compiler_params=pltpu.CompilerParams(
            dimension_semantics=("parallel", "arbitrary")),
    )(patches, conv_w, conv_b, q, wc, bc)


# ---------------------------------------------------------------------------
# Glue: im2col, sinusoidal positional encoding, parameter init, full forward.
# ---------------------------------------------------------------------------
def im2col_3x3(x_nhwc):
    n, h, w, c = x_nhwc.shape
    xp = jnp.pad(x_nhwc, ((0, 0), (1, 1), (1, 1), (0, 0)))
    patches = [xp[:, dh:dh + h, dw:dw + w, :] for dh in range(3) for dw in range(3)]
    patches = jnp.concatenate(patches, axis=-1)            # (N, H, W, 9*C)
    return patches.reshape(n, h * w, 9 * c)


def sinusoidal_pe(length, dim):
    pos = jnp.arange(length, dtype=jnp.float32)[:, None]
    div = jnp.exp(jnp.arange(0, dim, 2, dtype=jnp.float32)
                  * (-math.log(10000.0) / dim))
    pe = jnp.zeros((length, dim), jnp.float32)
    pe = pe.at[:, 0::2].set(jnp.sin(pos * div))
    pe = pe.at[:, 1::2].set(jnp.cos(pos * div))
    return pe


def init_params(key, in_ch, num_class):
    ks = jax.random.split(key, 6)
    p = {}
    p["conv_w"] = 0.05 * jax.random.normal(ks[0], (3, 3, in_ch, E), jnp.float32)
    p["conv_b"] = 0.01 * jax.random.normal(ks[1], (E,), jnp.float32)
    p["proj_w"] = (1.0 / math.sqrt(E)) * jax.random.normal(ks[2], (E, E), jnp.float32)
    p["proj_b"] = jnp.zeros((E,), jnp.float32)
    p["cls_w"] = (1.0 / math.sqrt(E)) * jax.random.normal(ks[3], (E, num_class), jnp.float32)
    p["cls_b"] = jnp.zeros((num_class,), jnp.float32)
    return p


def _position_queries(params):
    # Tiny batch-independent matmul: plain XLA, 1/sqrt(E) scale folded into the
    # projection so the kernel never re-scales.
    pe = sinusoidal_pe(T_PAD, E)
    scale = 1.0 / math.sqrt(E)
    q = pe @ (params["proj_w"] * scale) + params["proj_b"] * scale
    return q.astype(jnp.bfloat16)


def ronet_forward(x_nchw, params):
    n, c, h, w = x_nchw.shape
    L = h * w
    x_nhwc = jnp.transpose(x_nchw, (0, 2, 3, 1)).astype(jnp.bfloat16)

    # --- im2col patches, lane-dense K (padded to a multiple of 128), bf16 ---
    k_raw = 9 * c
    k_pad = max(128, ((k_raw + 127) // 128) * 128)
    patches = im2col_3x3(x_nhwc)                             # (N, L, 9*C)
    if k_pad > k_raw:
        patches = jnp.pad(patches, ((0, 0), (0, 0), (0, k_pad - k_raw)))

    conv_w = params["conv_w"].reshape(k_raw, E)              # (kh,kw,cin)->rows
    conv_w = jnp.pad(conv_w, ((0, k_pad - k_raw), (0, 0))).astype(jnp.bfloat16)
    conv_b = params["conv_b"].reshape(1, E).astype(jnp.float32)

    # --- position queries (no dedicated kernel) ---
    q = _position_queries(params)                            # (T_PAD, E) bf16

    # --- classifier lane-dense padding: zero weights, -1e30 bias for pads ---
    num_class = params["cls_w"].shape[1]
    wc = jnp.zeros((E, C_PAD), jnp.bfloat16).at[:, :num_class].set(
        params["cls_w"].astype(jnp.bfloat16))
    bc = jnp.full((1, C_PAD), NEG_INF, jnp.float32).at[0, :num_class].set(
        params["cls_b"].astype(jnp.float32))

    out = ronet_fused(patches, conv_w, conv_b, q, wc, bc, L=L)
    # slice away the padded query row and padded classes at the final consumer
    return out[:, :T, :num_class]


def ronet_reference(x_nchw, params):
    """Pure-jnp reference mirroring the kernel's bf16/f32 mixed precision
    (exact softmax division instead of the EUP approx reciprocal)."""
    n, c, h, w = x_nchw.shape
    L = h * w
    x_nhwc = jnp.transpose(x_nchw, (0, 2, 3, 1)).astype(jnp.bfloat16)
    k_raw = 9 * c
    patches = im2col_3x3(x_nhwc).astype(jnp.float32)                 # bf16-exact
    cw = params["conv_w"].reshape(k_raw, E).astype(jnp.bfloat16).astype(jnp.float32)
    feat = jnp.einsum("nlk,ke->nle", patches, cw) + params["conv_b"]
    feat = jnp.maximum(feat, 0.0).astype(jnp.bfloat16)

    q = _position_queries(params).astype(jnp.float32)
    kv = feat.astype(jnp.float32)
    scores = jnp.einsum("te,nle->ntl", q, kv)
    p = jax.nn.softmax(scores, axis=-1).astype(jnp.bfloat16).astype(jnp.float32)
    attn_vec = jnp.einsum("ntl,nle->nte", p, kv).astype(jnp.bfloat16).astype(jnp.float32)
    cls_w = params["cls_w"].astype(jnp.bfloat16).astype(jnp.float32)
    logits = jnp.einsum("nte,ec->ntc", attn_vec, cls_w) + params["cls_b"]
    return jax.nn.log_softmax(logits, axis=-1)[:, :T, :]


if __name__ == "__main__":
    key = jax.random.PRNGKey(0)
    k_x, k_p = jax.random.split(key)
    x = jax.random.normal(k_x, (2, 4, 16, 16), jnp.float32)   # NCHW like PyTorch
    params = init_params(k_p, in_ch=4, num_class=NUM_CLASS)

    out = jax.jit(ronet_forward)(x, params)
    out = jax.block_until_ready(out)

    assert out.shape == (2, T, NUM_CLASS), out.shape
    assert bool(jnp.all(jnp.isfinite(out)))
    # log_softmax rows must exponentiate-sum to 1 (padded classes carry ~0 mass)
    assert jnp.allclose(jnp.sum(jnp.exp(out), axis=-1), 1.0, atol=1e-4)

    # cross-check against a pure-JAX reference with matched precision
    ref = ronet_reference(x, params)
    max_err = float(jnp.max(jnp.abs(out - ref)))
    assert max_err < 5e-2, f"max abs diff vs reference: {max_err}"

    print("KERNEL_OK")
</pallas_src>

<mosaic_0001>
module attributes {stable_mosaic.version = 11 : i64} {
  func.func @_ronet_fused_kernel(%arg0: i32, %arg1: i32, %arg2: memref<1x128x128xbf16, #tpu.memory_space<vmem>>, %arg3: memref<128x512xbf16, #tpu.memory_space<vmem>>, %arg4: memref<1x512xf32, #tpu.memory_space<vmem>>, %arg5: memref<32x512xbf16, #tpu.memory_space<vmem>>, %arg6: memref<512x128xbf16, #tpu.memory_space<vmem>>, %arg7: memref<1x128xf32, #tpu.memory_space<vmem>>, %arg8: memref<1x32x128xf32, #tpu.memory_space<vmem>>, %arg9: memref<256x512xbf16, #tpu.memory_space<vmem>>) attributes {dimension_semantics = [#tpu.dimension_semantics<parallel>, #tpu.dimension_semantics<arbitrary>], iteration_bounds = array<i64: 2, 2>, scalar_prefetch = 0 : i64, scratch_operands = 1 : i64, tpu.core_type = #tpu.core_type<tc>, window_params = [{transform_indices = @transform_0, window_bounds = array<i64: 1, 128, 128>}, {pipeline_mode = #tpu.pipeline_mode<synchronous>, transform_indices = @transform_1, window_bounds = array<i64: 128, 512>}, {pipeline_mode = #tpu.pipeline_mode<synchronous>, transform_indices = @transform_2, window_bounds = array<i64: 1, 512>}, {pipeline_mode = #tpu.pipeline_mode<synchronous>, transform_indices = @transform_3, window_bounds = array<i64: 32, 512>}, {pipeline_mode = #tpu.pipeline_mode<synchronous>, transform_indices = @transform_4, window_bounds = array<i64: 512, 128>}, {pipeline_mode = #tpu.pipeline_mode<synchronous>, transform_indices = @transform_5, window_bounds = array<i64: 1, 128>}, {transform_indices = @transform_6, window_bounds = array<i64: 1, 32, 128>}]} {
    %c0 = arith.constant 0 : index
    %c0_0 = arith.constant 0 : index
    %c0_1 = arith.constant 0 : index
    %0 = vector.load %arg2[%c0, %c0_0, %c0_1] : memref<1x128x128xbf16, #tpu.memory_space<vmem>>, vector<1x128x128xbf16>
    %1 = vector.shape_cast %0 : vector<1x128x128xbf16> to vector<128x128xbf16>
    %c0_2 = arith.constant 0 : index
    %c0_3 = arith.constant 0 : index
    %2 = vector.load %arg3[%c0_2, %c0_3] : memref<128x512xbf16, #tpu.memory_space<vmem>>, vector<128x512xbf16>
    %cst = arith.constant dense<0.000000e+00> : vector<128x512xf32>
    %3 = tpu.matmul %1, %2, %cst {dimension_numbers = #tpu.dot_dimension_numbers<[1], [0], [0], [1], [0, 0, 1, 1], [], []>} : vector<128x128xbf16>, vector<128x512xbf16>, vector<128x512xf32> -> vector<128x512xf32>
    %c0_4 = arith.constant 0 : index
    %c0_5 = arith.constant 0 : index
    %4 = vector.load %arg4[%c0_4, %c0_5] : memref<1x512xf32, #tpu.memory_space<vmem>>, vector<1x512xf32>
    %5 = vector.broadcast %4 : vector<1x512xf32> to vector<128x512xf32>
    %6 = arith.addf %3, %5 : vector<128x512xf32>
    %cst_6 = arith.constant 0.000000e+00 : f32
    %7 = vector.broadcast %cst_6 : f32 to vector<128x512xf32>
    %8 = arith.maximumf %6, %7 : vector<128x512xf32>
    %c128_i32 = arith.constant 128 : i32
    %9 = arith.muli %arg1, %c128_i32 : i32
    %10 = tpu.assume_multiple %9, 128 : i32
    %11 = arith.truncf %8 : vector<128x512xf32> to vector<128x512xbf16>
    %12 = arith.index_cast %10 : i32 to index
    %c0_7 = arith.constant 0 : index
    %13 = vector.load %arg9[%12, %c0_7] : memref<256x512xbf16, #tpu.memory_space<vmem>>, vector<128x512xbf16>
    tpu.vector_store %arg9[%12, %c0_7], %11 {strides = array<i32>} : memref<256x512xbf16, #tpu.memory_space<vmem>>, vector<128x512xbf16>,
    %c1_i32 = arith.constant 1 : i32
    %14 = arith.cmpi eq, %arg1, %c1_i32 : i32
    %15 = arith.extui %14 : i1 to i32
    %c0_i32 = arith.constant 0 : i32
    %16 = arith.cmpi ne, %15, %c0_i32 : i32
    scf.if %16 {
      %c0_8 = arith.constant 0 : index
      %c0_9 = arith.constant 0 : index
      %17 = vector.load %arg9[%c0_8, %c0_9] : memref<256x512xbf16, #tpu.memory_space<vmem>>, vector<256x512xbf16>
      %c0_10 = arith.constant 0 : index
      %c0_11 = arith.constant 0 : index
      %18 = vector.load %arg5[%c0_10, %c0_11] : memref<32x512xbf16, #tpu.memory_space<vmem>>, vector<32x512xbf16>
      %cst_12 = arith.constant dense<0.000000e+00> : vector<32x256xf32>
      %19 = tpu.matmul %18, %17, %cst_12 {dimension_numbers = #tpu.dot_dimension_numbers<[1], [1], [0], [0], [0, 0, 1, 0], [], []>} : vector<32x512xbf16>, vector<256x512xbf16>, vector<32x256xf32> -> vector<32x256xf32>
      %cst_13 = arith.constant dense<0xFF800000> : vector<32xf32>
      %20 = vector.multi_reduction <maximumf>, %19, %cst_13 [1] : vector<32x256xf32> to vector<32xf32>
      %21 = vector.shape_cast %20 : vector<32xf32> to vector<32x1xf32>
      %22 = vector.broadcast %21 : vector<32x1xf32> to vector<32x256xf32>
      %23 = arith.subf %19, %22 : vector<32x256xf32>
      %24 = math.exp %23 : vector<32x256xf32>
      %cst_14 = arith.constant dense<0.000000e+00> : vector<32xf32>
      %25 = vector.multi_reduction <add>, %24, %cst_14 [1] : vector<32x256xf32> to vector<32xf32>
      %26 = vector.shape_cast %25 : vector<32xf32> to vector<32x1xf32>
      %27 = tpu.reciprocal %26 {approx = true} : vector<32x1xf32> -> vector<32x1xf32>
      %28 = vector.broadcast %27 : vector<32x1xf32> to vector<32x256xf32>
      %29 = arith.mulf %24, %28 : vector<32x256xf32>
      %30 = arith.truncf %29 : vector<32x256xf32> to vector<32x256xbf16>
      %cst_15 = arith.constant dense<0.000000e+00> : vector<32x512xf32>
      %31 = tpu.matmul %30, %17, %cst_15 {dimension_numbers = #tpu.dot_dimension_numbers<[1], [0], [0], [1], [0, 0, 1, 1], [], []>} : vector<32x256xbf16>, vector<256x512xbf16>, vector<32x512xf32> -> vector<32x512xf32>
      %32 = arith.truncf %31 : vector<32x512xf32> to vector<32x512xbf16>
      %c0_16 = arith.constant 0 : index
      %c0_17 = arith.constant 0 : index
      %33 = vector.load %arg6[%c0_16, %c0_17] : memref<512x128xbf16, #tpu.memory_space<vmem>>, vector<512x128xbf16>
      %cst_18 = arith.constant dense<0.000000e+00> : vector<32x128xf32>
      %34 = tpu.matmul %32, %33, %cst_18 {dimension_numbers = #tpu.dot_dimension_numbers<[1], [0], [0], [1], [0, 0, 1, 1], [], []>} : vector<32x512xbf16>, vector<512x128xbf16>, vector<32x128xf32> -> vector<32x128xf32>
      %c0_19 = arith.constant 0 : index
      %c0_20 = arith.constant 0 : index
      %35 = vector.load %arg7[%c0_19, %c0_20] : memref<1x128xf32, #tpu.memory_space<vmem>>, vector<1x128xf32>
      %36 = vector.broadcast %35 : vector<1x128xf32> to vector<32x128xf32>
      %37 = arith.addf %34, %36 : vector<32x128xf32>
      %cst_21 = arith.constant dense<0xFF800000> : vector<32xf32>
      %38 = vector.multi_reduction <maximumf>, %37, %cst_21 [1] : vector<32x128xf32> to vector<32xf32>
      %39 = vector.shape_cast %38 : vector<32xf32> to vector<32x1xf32>
      %40 = vector.broadcast %39 : vector<32x1xf32> to vector<32x128xf32>
      %41 = arith.subf %37, %40 : vector<32x128xf32>
      %42 = math.exp %41 : vector<32x128xf32>
      %cst_22 = arith.constant dense<0.000000e+00> : vector<32xf32>
      %43 = vector.multi_reduction <add>, %42, %cst_22 [1] : vector<32x128xf32> to vector<32xf32>
      %44 = vector.shape_cast %43 : vector<32xf32> to vector<32x1xf32>
      %45 = math.log %44 : vector<32x1xf32>
      %46 = vector.broadcast %45 : vector<32x1xf32> to vector<32x128xf32>
      %47 = arith.subf %41, %46 : vector<32x128xf32>
      %c0_23 = arith.constant 0 : index
      %c0_24 = arith.constant 0 : index
      %c0_25 = arith.constant 0 : index
      %48 = vector.load %arg8[%c0_23, %c0_24, %c0_25] : memref<1x32x128xf32, #tpu.memory_space<vmem>>, vector<1x32x128xf32>
      %49 = vector.shape_cast %48 : vector<1x32x128xf32> to vector<32x128xf32>
      %50 = vector.shape_cast %47 : vector<32x128xf32> to vector<1x32x128xf32>
      tpu.vector_store %arg8[%c0_23, %c0_24, %c0_25], %50 {strides = array<i32>} : memref<1x32x128xf32, #tpu.memory_space<vmem>>, vector<1x32x128xf32>,
    } else {
    }
    return
  }
  func.func @transform_0(%arg0: i32, %arg1: i32) -> (i32, i32, i32) {
    %c0_i32 = arith.constant 0 : i32
    %c0_i32_0 = arith.constant 0 : i32
    return %arg0, %arg1, %c0_i32 : i32, i32, i32
  }
  func.func @transform_1(%arg0: i32, %arg1: i32) -> (i32, i32) {
    %c0_i32 = arith.constant 0 : i32
    %c0_i32_0 = arith.constant 0 : i32
    %c0_i32_1 = arith.constant 0 : i32
    return %c0_i32, %c0_i32_0 : i32, i32
  }
  func.func @transform_2(%arg0: i32, %arg1: i32) -> (i32, i32) {
    %c0_i32 = arith.constant 0 : i32
    %c0_i32_0 = arith.constant 0 : i32
    %c0_i32_1 = arith.constant 0 : i32
    return %c0_i32, %c0_i32_0 : i32, i32
  }
  func.func @transform_3(%arg0: i32, %arg1: i32) -> (i32, i32) {
    %c0_i32 = arith.constant 0 : i32
    %c0_i32_0 = arith.constant 0 : i32
    %c0_i32_1 = arith.constant 0 : i32
    return %c0_i32, %c0_i32_0 : i32, i32
  }
  func.func @transform_4(%arg0: i32, %arg1: i32) -> (i32, i32) {
    %c0_i32 = arith.constant 0 : i32
    %c0_i32_0 = arith.constant 0 : i32
    %c0_i32_1 = arith.constant 0 : i32
    return %c0_i32, %c0_i32_0 : i32, i32
  }
  func.func @transform_5(%arg0: i32, %arg1: i32) -> (i32, i32) {
    %c0_i32 = arith.constant 0 : i32
    %c0_i32_0 = arith.constant 0 : i32
    %c0_i32_1 = arith.constant 0 : i32
    return %c0_i32, %c0_i32_0 : i32, i32
  }
  func.func @transform_6(%arg0: i32, %arg1: i32) -> (i32, i32, i32) {
    %c0_i32 = arith.constant 0 : i32
    %c0_i32_0 = arith.constant 0 : i32
    %c0_i32_1 = arith.constant 0 : i32
    return %arg0, %c0_i32, %c0_i32_0 : i32, i32, i32
  }
}

</mosaic_0001>

<llo_original>
// kernel: ronet_forward.1
$region0: #{ronet_forward.1}
  #allocation0 [shape = 'u32[]', space=smem, size = 0x4, offset = 0x4, fixed_abs, tag = 'smem constant byte address 0x4 - core index']
  #allocation1 [shape = 'u32[144,128]{1,0:T(1,128)}', space=vmem, size = 0x12000, scoped, tag = 'internal scratch']
  #allocation2 [shape = 'bf16[256,512]{1,0:T(16,128)(2,1)}', space=vmem, size = 0x40000, scoped, tag = 'scratch operand']
  %s0 = inlined_call_operand.vmem [shape: bf16[2,256,128], index: 0, kind: input, shape index: {}]
  %s1 = inlined_call_operand.vmem [shape: bf16[128,512], index: 1, kind: input, shape index: {}]
  %s2 = inlined_call_operand.vmem [shape: f32[1,512], index: 2, kind: input, shape index: {}]
  %s3 = inlined_call_operand.vmem [shape: bf16[32,512], index: 3, kind: input, shape index: {}]
  %s4 = inlined_call_operand.vmem [shape: bf16[512,128], index: 4, kind: input, shape index: {}]
  %s5 = inlined_call_operand.vmem [shape: f32[1,128], index: 5, kind: input, shape index: {}]
  %s6 = inlined_call_operand.vmem [shape: f32[2,32,128], index: 6, kind: output, shape index: {}]
  %s7 = sld [smem:[#allocation0]]
  $region61: #{ronet_forward.1} parent=0
    _
  %s9 = ssub.s32 1, %s7
  %s10 = scalar_select 0, %s9, %s7
  loop: start=0, step=1, limit=6
  $region2: #{ronet_forward.1} parent=0 // loop_pre_header
    _
  $region3: #{ronet_forward.1} parent=0 // loop_header
    %s12 = sphi 0, %s16
    %p13 = scmp.ge.s32.totalorder %s12, 6
    %s19 = sphi 0, %s31
    %s20 = sphi 0, %s27
    %s21 = sphi 0, %s19
    %s22 = sphi 0, %s20
    %s23 = sphi 0, %s21
    %s24 = sphi 0, %s22
    %s36 = sphi 0, %s38
    %s39 = sphi 0, %s36
    %s40 = sphi 0, %s39
    %s56 = sphi 0, %s40
    %s60 = sphi 0, %s60
    %s62 = sphi 0, %s60
    %s63 = sphi 0, %s62
    %s77 = sphi 0, %s63
    %s81 = sphi 0, %s81
    %s83 = sphi 0, %s81
    %s84 = sphi 0, %s83
    %s98 = sphi 0, %s84
    %s102 = sphi 0, %s102
    %s104 = sphi 0, %s102
    %s105 = sphi 0, %s104
    %s119 = sphi 0, %s105
    %s123 = sphi 0, %s123
    %s125 = sphi 0, %s123
    %s126 = sphi 0, %s125
    %s140 = sphi 0, %s126
    %s144 = sphi 0, %s144
    %s146 = sphi 0, %s144
    %s147 = sphi 0, %s146
    %s161 = sphi 0, %s147
    %s167 = sphi 0, %s169
    %s170 = sphi 0, %s167
    %s171 = sphi 0, %s170
    %s187 = sphi 0, %s171
  $region4: #{ronet_forward.1} parent=0 // loop_header_branch
    %15 = sbr.rel (%p13) target = $region8
  $region5: #{ronet_forward.1} parent=0 // loop_body
    %s17 = ssub.s32 %s12, 1
    %s18 = ssub.s32 %s12, 2
    %s25 = sadd.s32 1, %s20
    %p26 = scmp.ge.s32.totalorder %s25, 2
    %s27 = scalar_select %p26, 0, %s25
    %s28 = sadd.s32 1, %s19
    %s29 = scalar_select %p26, %s28, %s19
    %p30 = scmp.ge.s32.totalorder %s29, 2
    %s31 = scalar_select %p30, 0, %s29
    %s32 = ssub.s32 %s19, %s31
    %s33 = ssub.s32 %s20, %s27
    %s34 = sor.u32 %s32, %s33
    %p35 = scmp.eq.s32.totalorder %s34, 0
    %s37 = sadd.s32 %s36, 1
    %s38 = scalar_select %p35, %s36, %s37
    %p41 = pneg %p35
    %p42 = scmp.eq.s32.totalorder %s12, 3
    %p43 = por %p41, %p42
    %p44 = scmp.ne.s32.totalorder %s36, %s39
    %p45 = scmp.eq.s32.totalorder %s12, 0
    %p46 = por %p44, %p45
    %p47 = scmp.ne.s32.totalorder %s36, %s39
    %p48 = scmp.eq.s32.totalorder %s17, 3
    %p49 = por %p47, %p48
    %p50 = scmp.ne.s32.totalorder %s39, %s40
    %p51 = scmp.eq.s32.totalorder %s17, 0
    %p52 = por %p50, %p51
    %p53 = scmp.ne.s32.totalorder %s39, %s40
    %p54 = scmp.eq.s32.totalorder %s18, 3
    %p55 = por %p53, %p54
    %p57 = scmp.ne.s32.totalorder %s40, %s56
    %p58 = scmp.eq.s32.totalorder %s18, 0
    %p59 = por %p57, %p58
    %s61 = sadd.s32 %s60, 1
    %p64 = scmp.eq.s32.totalorder %s12, 3
    %p65 = scmp.ne.s32.totalorder %s60, %s62
    %p66 = scmp.eq.s32.totalorder %s12, 0
    %p67 = por %p65, %p66
    %p68 = scmp.ne.s32.totalorder %s60, %s62
    %p69 = scmp.eq.s32.totalorder %s17, 3
    %p70 = por %p68, %p69
    %p71 = scmp.ne.s32.totalorder %s62, %s63
    %p72 = scmp.eq.s32.totalorder %s17, 0
    %p73 = por %p71, %p72
    %p74 = scmp.ne.s32.totalorder %s62, %s63
    %p75 = scmp.eq.s32.totalorder %s18, 3
    %p76 = por %p74, %p75
    %p78 = scmp.ne.s32.totalorder %s63, %s77
    %p79 = scmp.eq.s32.totalorder %s18, 0
    %p80 = por %p78, %p79
    %s82 = sadd.s32 %s81, 1
    %p85 = scmp.eq.s32.totalorder %s12, 3
    %p86 = scmp.ne.s32.totalorder %s81, %s83
    %p87 = scmp.eq.s32.totalorder %s12, 0
    %p88 = por %p86, %p87
    %p89 = scmp.ne.s32.totalorder %s81, %s83
    %p90 = scmp.eq.s32.totalorder %s17, 3
    %p91 = por %p89, %p90
    %p92 = scmp.ne.s32.totalorder %s83, %s84
    %p93 = scmp.eq.s32.totalorder %s17, 0
    %p94 = por %p92, %p93
    %p95 = scmp.ne.s32.totalorder %s83, %s84
    %p96 = scmp.eq.s32.totalorder %s18, 3
    %p97 = por %p95, %p96
    %p99 = scmp.ne.s32.totalorder %s84, %s98
    %p100 = scmp.eq.s32.totalorder %s18, 0
    %p101 = por %p99, %p100
    %s103 = sadd.s32 %s102, 1
    %p106 = scmp.eq.s32.totalorder %s12, 3
    %p107 = scmp.ne.s32.totalorder %s102, %s104
    %p108 = scmp.eq.s32.totalorder %s12, 0
    %p109 = por %p107, %p108
    %p110 = scmp.ne.s32.totalorder %s102, %s104
    %p111 = scmp.eq.s32.totalorder %s17, 3
    %p112 = por %p110, %p111
    %p113 = scmp.ne.s32.totalorder %s104, %s105
    %p114 = scmp.eq.s32.totalorder %s17, 0
    %p115 = por %p113, %p114
    %p116 = scmp.ne.s32.totalorder %s104, %s105
    %p117 = scmp.eq.s32.totalorder %s18, 3
    %p118 = por %p116, %p117
    %p120 = scmp.ne.s32.totalorder %s105, %s119
    %p121 = scmp.eq.s32.totalorder %s18, 0
    %p122 = por %p120, %p121
    %s124 = sadd.s32 %s123, 1
    %p127 = scmp.eq.s32.totalorder %s12, 3
    %p128 = scmp.ne.s32.totalorder %s123, %s125
    %p129 = scmp.eq.s32.totalorder %s12, 0
    %p130 = por %p128, %p129
    %p131 = scmp.ne.s32.totalorder %s123, %s125
    %p132 = scmp.eq.s32.totalorder %s17, 3
    %p133 = por %p131, %p132
    %p134 = scmp.ne.s32.totalorder %s125, %s126
    %p135 = scmp.eq.s32.totalorder %s17, 0
    %p136 = por %p134, %p135
    %p137 = scmp.ne.s32.totalorder %s125, %s126
    %p138 = scmp.eq.s32.totalorder %s18, 3
    %p139 = por %p137, %p138
    %p141 = scmp.ne.s32.totalorder %s126, %s140
    %p142 = scmp.eq.s32.totalorder %s18, 0
    %p143 = por %p141, %p142
    %s145 = sadd.s32 %s144, 1
    %p148 = scmp.eq.s32.totalorder %s12, 3
    %p149 = scmp.ne.s32.totalorder %s144, %s146
    %p150 = scmp.eq.s32.totalorder %s12, 0
    %p151 = por %p149, %p150
    %p152 = scmp.ne.s32.totalorder %s144, %s146
    %p153 = scmp.eq.s32.totalorder %s17, 3
    %p154 = por %p152, %p153
    %p155 = scmp.ne.s32.totalorder %s146, %s147
    %p156 = scmp.eq.s32.totalorder %s17, 0
    %p157 = por %p155, %p156
    %p158 = scmp.ne.s32.totalorder %s146, %s147
    %p159 = scmp.eq.s32.totalorder %s18, 3
    %p160 = por %p158, %p159
    %p162 = scmp.ne.s32.totalorder %s147, %s161
    %p163 = scmp.eq.s32.totalorder %s18, 0
    %p164 = por %p162, %p163
    %s165 = ssub.s32 %s19, %s31
    %p166 = scmp.eq.s32.totalorder %s165, 0
    %s168 = sadd.s32 %s167, 1
    %s169 = scalar_select %p166, %s167, %s168
    %p172 = pneg %p166
    %p173 = scmp.eq.s32.totalorder %s12, 3
    %p174 = por %p172, %p173
    %p175 = scmp.ne.s32.totalorder %s167, %s170
    %p176 = scmp.eq.s32.totalorder %s12, 0
    %p177 = por %p175, %p176
    %p178 = scmp.ne.s32.totalorder %s167, %s170
    %p179 = scmp.eq.s32.totalorder %s17, 3
    %p180 = por %p178, %p179
    %p181 = scmp.ne.s32.totalorder %s170, %s171
    %p182 = scmp.eq.s32.totalorder %s17, 0
    %p183 = por %p181, %p182
    %p184 = scmp.ne.s32.totalorder %s170, %s171
    %p185 = scmp.eq.s32.totalorder %s18, 3
    %p186 = por %p184, %p185
    %p188 = scmp.ne.s32.totalorder %s171, %s187
    %p189 = scmp.eq.s32.totalorder %s18, 0
    %p190 = por %p188, %p189
    %p191 = scmp.le.s32.totalorder 1, %s12
    %p192 = scmp.lt.s32.totalorder %s12, 5
    %p193 = pnand %p191, %p192
    %p194 = pneg %p193
    // Predicated region
    $region9: #{ronet_forward.1} parent=5 // pred_check
      _
    $region10: #{ronet_forward.1} parent=5 // pred_check_branch
      %196 = sbr.rel (%p193) target = $region12
    $region11: #{ronet_forward.1} parent=5 // pred_region
      %s197 = ssub.s32 %s12, 1
      // Predicated region
      $region13: #{ronet_forward.1} parent=11 // pred_check
        %p198 = pneg %p73
      $region14: #{ronet_forward.1} parent=11 // pred_check_branch
        %200 = sbr.rel (%p198) target = $region16
      $region15: #{ronet_forward.1} parent=11 // pred_region
        _
      $region16: #{ronet_forward.1} parent=11 // pred_fallthru
        _
      // Predicated region
      $region17: #{ronet_forward.1} parent=11 // pred_check
        %p201 = pneg %p94
      $region18: #{ronet_forward.1} parent=11 // pred_check_branch
        %203 = sbr.rel (%p201) target = $region20
      $region19: #{ronet_forward.1} parent=11 // pred_region
        _
      $region20: #{ronet_forward.1} parent=11 // pred_fallthru
        _
      // Predicated region
      $region21: #{ronet_forward.1} parent=11 // pred_check
        %p204 = pneg %p115
      $region22: #{ronet_forward.1} parent=11 // pred_check_branch
        %206 = sbr.rel (%p204) target = $region24
      $region23: #{ronet_forward.1} parent=11 // pred_region
        _
      $region24: #{ronet_forward.1} parent=11 // pred_fallthru
        _
      // Predicated region
      $region25: #{ronet_forward.1} parent=11 // pred_check
        %p207 = pneg %p136
      $region26: #{ronet_forward.1} parent=11 // pred_check_branch
        %209 = sbr.rel (%p207) target = $region28
      $region27: #{ronet_forward.1} parent=11 // pred_region
        _
      $region28: #{ronet_forward.1} parent=11 // pred_fallthru
        _
      // Predicated region
      $region29: #{ronet_forward.1} parent=11 // pred_check
        %p210 = pneg %p157
      $region30: #{ronet_forward.1} parent=11 // pred_check_branch
        %212 = sbr.rel (%p210) target = $region32
      $region31: #{ronet_forward.1} parent=11 // pred_region
        _
      $region32: #{ronet_forward.1} parent=11 // pred_fallthru
        _
    $region12: #{ronet_forward.1} parent=5 // pred_fallthru
      _
    %p213 = scmp.lt.s32.totalorder %s12, 4
    // Predicated region
    $region33: #{ronet_forward.1} parent=5 // pred_check
      %p214 = pneg %p213
    $region34: #{ronet_forward.1} parent=5 // pred_check_branch
      %216 = sbr.rel (%p214) target = $region36
    $region35: #{ronet_forward.1} parent=5 // pred_region
      // Predicated region
      $region37: #{ronet_forward.1} parent=35 // pred_check
        %p217 = pneg %p46
      $region38: #{ronet_forward.1} parent=35 // pred_check_branch
        %219 = sbr.rel (%p217) target = $region40
      $region39: #{ronet_forward.1} parent=35 // pred_region
        %s220 = smul.u32 16, %s20
        %p221 = scmp.lt.s32.totalorder %s19, 1
        %s222 = scalar_select %p221, %s19, 1
        %p223 = scmp.lt.s32.totalorder %s220, 31
        %s224 = scalar_select %p223, %s220, 31
        %s225 = smul.addr %s222, 32
        %s226 = sadd.s32 %s224, %s225
        %s227 = smul.addr %s226, 4
        %s228 = scalar_lea.vmem %s0, %s227
        %s229 = smul.u32 16, %s20
      $region40: #{ronet_forward.1} parent=35 // pred_fallthru
        _
    $region36: #{ronet_forward.1} parent=5 // pred_fallthru
      _
    %p230 = scmp.le.s32.totalorder 1, %s12
    %p231 = scmp.lt.s32.totalorder %s12, 5
    %p232 = pnand %p230, %p231
    %p233 = pneg %p232
    // Predicated region
    $region41: #{ronet_forward.1} parent=5 // pred_check
      _
    $region42: #{ronet_forward.1} parent=5 // pred_check_branch
      %235 = sbr.rel (%p232) target = $region44
    $region43: #{ronet_forward.1} parent=5 // pred_region
      %s236 = ssub.s32 %s12, 1
      %s237 = smul.u32 16, %s22
      %p238 = scmp.lt.s32.totalorder %s21, 1
      %s239 = scalar_select %p238, %s21, 1
      %p240 = scmp.lt.s32.totalorder %s237, 31
      %s241 = scalar_select %p240, %s237, 31
      %s242 = smul.addr %s239, 32
      %s243 = sadd.s32 %s241, %s242
      %s244 = smul.addr %s243, 4
      %s245 = scalar_lea.vmem %s0, %s244
      %p246 = pneg %p52
      %p247 = pneg %p49
      %p248 = pneg %p73
      %p249 = pneg %p70
      %p250 = pneg %p94
      %p251 = pneg %p91
      %p252 = pneg %p115
      %p253 = pneg %p112
      %p254 = pneg %p136
      %p255 = pneg %p133
      %p256 = pneg %p157
      %p257 = pneg %p154
      %p258 = pneg %p183
      %p259 = pneg %p180
      %p260 = scmp.lt.s32.totalorder %s21, 1
      %s261 = scalar_select %p260, %s21, 1
      %s262 = smul.addr %s261, 4
      %s263 = smul.addr %s262, 8
      %s264 = scalar_lea.vmem %s6, %s263
      %s265 = smul.u32 16, %s22
      %p266 = scmp.lt.s32.totalorder %s21, 1
      %s267 = scalar_select %p266, %s21, 1
      %p268 = scmp.lt.s32.totalorder %s265, 31
      %s269 = scalar_select %p268, %s265, 31
      %s270 = smul.addr %s267, 32
      %s271 = sadd.s32 %s269, %s270
      %s272 = smul.addr %s271, 4
      %s273 = scalar_lea.vmem %s0, %s272
      %s274 = smul.u32 16, %s22
      %p275 = scmp.lt.s32.totalorder %s21, 1
      %s276 = scalar_select %p275, %s21, 1
      %s277 = smul.addr %s276, 4
      %s278 = smul.addr %s277, 8
      %s279 = scalar_lea.vmem %s6, %s278
      %v281 = vld [vmem:[%s273] sm:$0xf]
      %v282 = vld [vmem:[%s273 + $0x4] sm:$0xf]
      %v283 = vld [vmem:[%s273 + $0x8] sm:$0xf]
      %v284 = vld [vmem:[%s273 + $0xc] sm:$0xf]
      %v285 = vld [vmem:[%s273 + $0x10] sm:$0xf]
      %v286 = vld [vmem:[%s273 + $0x14] sm:$0xf]
      %v287 = vld [vmem:[%s273 + $0x18] sm:$0xf]
      %v288 = vld [vmem:[%s273 + $0x1c] sm:$0xf]
      %v289 = vld [vmem:[%s273 + $0x20] sm:$0xf]
      %v290 = vld [vmem:[%s273 + $0x24] sm:$0xf]
      %v291 = vld [vmem:[%s273 + $0x28] sm:$0xf]
      %v292 = vld [vmem:[%s273 + $0x2c] sm:$0xf]
      %v293 = vld [vmem:[%s273 + $0x30] sm:$0xf]
      %v294 = vld [vmem:[%s273 + $0x34] sm:$0xf]
      %v295 = vld [vmem:[%s273 + $0x38] sm:$0xf]
      %v296 = vld [vmem:[%s273 + $0x3c] sm:$0xf]
      %v297 = vld [vmem:[%s1] sm:$0xff]
      %v298 = vld [vmem:[%s1 + $0x8] sm:$0xff]
      %v299 = vld [vmem:[%s1 + $0x10] sm:$0xff]
      %v300 = vld [vmem:[%s1 + $0x18] sm:$0xff]
      %v301 = vld [vmem:[%s1 + $0x20] sm:$0xff]
      %v302 = vld [vmem:[%s1 + $0x28] sm:$0xff]
      %v303 = vld [vmem:[%s1 + $0x30] sm:$0xff]
      %v304 = vld [vmem:[%s1 + $0x38] sm:$0xff]
      %v305 = vld [vmem:[%s1 + $0x40] sm:$0xff]
      %v306 = vld [vmem:[%s1 + $0x48] sm:$0xff]
      %v307 = vld [vmem:[%s1 + $0x50] sm:$0xff]
      %v308 = vld [vmem:[%s1 + $0x58] sm:$0xff]
      %v309 = vld [vmem:[%s1 + $0x60] sm:$0xff]
      %v310 = vld [vmem:[%s1 + $0x68] sm:$0xff]
      %v311 = vld [vmem:[%s1 + $0x70] sm:$0xff]
      %v312 = vld [vmem:[%s1 + $0x78] sm:$0xff]
      %v313 = vld [vmem:[%s1 + $0x80] sm:$0xff]
      %v314 = vld [vmem:[%s1 + $0x88] sm:$0xff]
      %v315 = vld [vmem:[%s1 + $0x90] sm:$0xff]
      %v316 = vld [vmem:[%s1 + $0x98] sm:$0xff]
      %v317 = vld [vmem:[%s1 + $0xa0] sm:$0xff]
      %v318 = vld [vmem:[%s1 + $0xa8] sm:$0xff]
      %v319 = vld [vmem:[%s1 + $0xb0] sm:$0xff]
      %v320 = vld [vmem:[%s1 + $0xb8] sm:$0xff]
      %v321 = vld [vmem:[%s1 + $0xc0] sm:$0xff]
      %v322 = vld [vmem:[%s1 + $0xc8] sm:$0xff]
      %v323 = vld [vmem:[%s1 + $0xd0] sm:$0xff]
      %v324 = vld [vmem:[%s1 + $0xd8] sm:$0xff]
      %v325 = vld [vmem:[%s1 + $0xe0] sm:$0xff]
      %v326 = vld [vmem:[%s1 + $0xe8] sm:$0xff]
      %v327 = vld [vmem:[%s1 + $0xf0] sm:$0xff]
      %v328 = vld [vmem:[%s1 + $0xf8] sm:$0xff]
      %v329 = vld [vmem:[%s2] sm:$0xf]
      %v331 = vlaneseq
      %v332 = vshrl.u32 %v331, 7
      %v333 = vsub.s32 0, %v332
      %v334 = vrot.slane %v329, %v333
      %v335 = vlaneseq
      %v336 = vshrl.u32 %v335, 7
      %v337 = vsub.s32 1, %v336
      %v338 = vrot.slane %v329, %v337
      %v339 = vlaneseq
      %v340 = vshrl.u32 %v339, 7
      %v341 = vsub.s32 2, %v340
      %v342 = vrot.slane %v329, %v341
      %v343 = vlaneseq
      %v344 = vshrl.u32 %v343, 7
      %v345 = vsub.s32 3, %v344
      %v346 = vrot.slane %v329, %v345
      %v367 = vunpack.c.l.b16 %v281
      %v368 = vunpack.c.l.b16 %v282
      %v369 = vunpack.c.l.b16 %v283
      %v370 = vunpack.c.l.b16 %v284
      %v371 = vunpack.c.l.b16 %v285
      %v372 = vunpack.c.l.b16 %v286
      %v373 = vunpack.c.l.b16 %v287
      %v374 = vunpack.c.l.b16 %v288
      %v375 = vunpack.c.l.b16 %v289
      %v376 = vunpack.c.l.b16 %v290
      %v377 = vunpack.c.l.b16 %v291
      %v378 = vunpack.c.l.b16 %v292
      %v379 = vunpack.c.l.b16 %v293
      %v380 = vunpack.c.l.b16 %v294
      %v381 = vunpack.c.l.b16 %v295
      %v382 = vunpack.c.l.b16 %v296
      %v383 = vpack.c.b16 %v368, %v367
      %v384 = vpack.c.b16 %v370, %v369
      %v385 = vpack.c.b16 %v372, %v371
      %v386 = vpack.c.b16 %v374, %v373
      %v387 = vpack.c.b16 %v376, %v375
      %v388 = vpack.c.b16 %v378, %v377
      %v389 = vpack.c.b16 %v380, %v379
      %v390 = vpack.c.b16 %v382, %v381
      %v431 = vunpack.c.l.b16 %v297
      %v432 = vunpack.c.h.b16 %v297
      %v433 = vunpack.c.l.b16 %v298
      %v434 = vunpack.c.h.b16 %v298
      %v435 = vunpack.c.l.b16 %v299
      %v436 = vunpack.c.h.b16 %v299
      %v437 = vunpack.c.l.b16 %v300
      %v438 = vunpack.c.h.b16 %v300
      %v439 = vunpack.c.l.b16 %v301
      %v440 = vunpack.c.h.b16 %v301
      %v441 = vunpack.c.l.b16 %v302
      %v442 = vunpack.c.h.b16 %v302
      %v443 = vunpack.c.l.b16 %v303
      %v444 = vunpack.c.h.b16 %v303
      %v445 = vunpack.c.l.b16 %v304
      %v446 = vunpack.c.h.b16 %v304
      %v447 = vunpack.c.l.b16 %v305
      %v448 = vunpack.c.h.b16 %v305
      %v449 = vunpack.c.l.b16 %v306
      %v450 = vunpack.c.h.b16 %v306
      %v451 = vunpack.c.l.b16 %v307
      %v452 = vunpack.c.h.b16 %v307
      %v453 = vunpack.c.l.b16 %v308
      %v454 = vunpack.c.h.b16 %v308
      %v455 = vunpack.c.l.b16 %v309
      %v456 = vunpack.c.h.b16 %v309
      %v457 = vunpack.c.l.b16 %v310
      %v458 = vunpack.c.h.b16 %v310
      %v459 = vunpack.c.l.b16 %v311
      %v460 = vunpack.c.h.b16 %v311
      %v461 = vunpack.c.l.b16 %v312
      %v462 = vunpack.c.h.b16 %v312
      %v463 = vunpack.c.l.b16 %v313
      %v464 = vunpack.c.h.b16 %v313
      %v465 = vunpack.c.l.b16 %v314
      %v466 = vunpack.c.h.b16 %v314
      %v467 = vunpack.c.l.b16 %v315
      %v468 = vunpack.c.h.b16 %v315
      %v469 = vunpack.c.l.b16 %v316
      %v470 = vunpack.c.h.b16 %v316
      %v471 = vunpack.c.l.b16 %v317
      %v472 = vunpack.c.h.b16 %v317
      %v473 = vunpack.c.l.b16 %v318
      %v474 = vunpack.c.h.b16 %v318
      %v475 = vunpack.c.l.b16 %v319
      %v476 = vunpack.c.h.b16 %v319
      %v477 = vunpack.c.l.b16 %v320
      %v478 = vunpack.c.h.b16 %v320
      %v479 = vunpack.c.l.b16 %v321
      %v480 = vunpack.c.h.b16 %v321
      %v481 = vunpack.c.l.b16 %v322
      %v482 = vunpack.c.h.b16 %v322
      %v483 = vunpack.c.l.b16 %v323
      %v484 = vunpack.c.h.b16 %v323
      %v485 = vunpack.c.l.b16 %v324
      %v486 = vunpack.c.h.b16 %v324
      %v487 = vunpack.c.l.b16 %v325
      %v488 = vunpack.c.h.b16 %v325
      %v489 = vunpack.c.l.b16 %v326
      %v490 = vunpack.c.h.b16 %v326
      %v491 = vunpack.c.l.b16 %v327
      %v492 = vunpack.c.h.b16 %v327
      %v493 = vunpack.c.l.b16 %v328
      %v494 = vunpack.c.h.b16 %v328
      %v495 = vpack.c.b16 %v435, %v431
      %v496 = vpack.c.b16 %v436, %v432
      %v497 = vpack.c.b16 %v437, %v433
      %v498 = vpack.c.b16 %v438, %v434
      %v499 = vpack.c.b16 %v443, %v439
      %v500 = vpack.c.b16 %v444, %v440
      %v501 = vpack.c.b16 %v445, %v441
      %v502 = vpack.c.b16 %v446, %v442
      %v503 = vpack.c.b16 %v451, %v447
      %v504 = vpack.c.b16 %v452, %v448
      %v505 = vpack.c.b16 %v453, %v449
      %v506 = vpack.c.b16 %v454, %v450
      %v507 = vpack.c.b16 %v459, %v455
      %v508 = vpack.c.b16 %v460, %v456
      %v509 = vpack.c.b16 %v461, %v457
      %v510 = vpack.c.b16 %v462, %v458
      %v511 = vpack.c.b16 %v467, %v463
      %v512 = vpack.c.b16 %v468, %v464
      %v513 = vpack.c.b16 %v469, %v465
      %v514 = vpack.c.b16 %v470, %v466
      %v515 = vpack.c.b16 %v475, %v471
      %v516 = vpack.c.b16 %v476, %v472
      %v517 = vpack.c.b16 %v477, %v473
      %v518 = vpack.c.b16 %v478, %v474
      %v519 = vpack.c.b16 %v483, %v479
      %v520 = vpack.c.b16 %v484, %v480
      %v521 = vpack.c.b16 %v485, %v481
      %v522 = vpack.c.b16 %v486, %v482
      %v523 = vpack.c.b16 %v491, %v487
      %v524 = vpack.c.b16 %v492, %v488
      %v525 = vpack.c.b16 %v493, %v489
      %v526 = vpack.c.b16 %v494, %v490
      %559 = vmatprep.subr.bf16.mxu0 %v496
      %560 = vmatpush1.bf16.msra.mxu0 %v495
      %561 = vmatprep.subr.bf16.mxu0 %v500
      %562 = vmatpush1.bf16.msra.mxu0 %v499
      %563 = vmatprep.subr.bf16.mxu0 %v504
      %564 = vmatpush1.bf16.msra.mxu0 %v503
      %565 = vmatprep.subr.bf16.mxu0 %v508
      %566 = vmatpush1.bf16.msra.mxu0 %v507
      %567 = vmatprep.subr.bf16.mxu0 %v512
      %568 = vmatpush1.bf16.msra.mxu0 %v511
      %569 = vmatprep.subr.bf16.mxu0 %v516
      %570 = vmatpush1.bf16.msra.mxu0 %v515
      %571 = vmatprep.subr.bf16.mxu0 %v520
      %572 = vmatpush1.bf16.msra.mxu0 %v519
      %573 = vmatprep.subr.bf16.mxu0 %v524
      %574 = vmatpush1.bf16.msra.mxu0 %v523
      %575 = vmatprep.subr.bf16.mxu0 0
      %576 = vmatpush1.bf16.msra.mxu0 0
      %577 = vmatprep.subr.bf16.mxu0 0
      %578 = vmatpush1.bf16.msra.mxu0 0
      %579 = vmatprep.subr.bf16.mxu0 0
      %580 = vmatpush1.bf16.msra.mxu0 0
      %581 = vmatprep.subr.bf16.mxu0 0
      %582 = vmatpush1.bf16.msra.mxu0 0
      %583 = vmatprep.subr.bf16.mxu0 0
      %584 = vmatpush1.bf16.msra.mxu0 0
      %585 = vmatprep.subr.bf16.mxu0 0
      %586 = vmatpush1.bf16.msra.mxu0 0
      %587 = vmatprep.subr.bf16.mxu0 0
      %588 = vmatpush1.bf16.msra.mxu0 0
      %589 = vmatprep.subr.bf16.mxu0 0
      %590 = vmatpush1.bf16.msra.mxu0 0
      %591 = vmatprep.mubr.bf16.mxu0 0
      %592 = vmatmul.mubr.bf16.gmra.mrb[0].mxu0 %v383
      %v593 = vpop.f32.mrb[0].mxu0
      %v594 = vadd.f32 %v334, %v593
      %v595 = vpop.f32.mrb[0].mxu0
      %v596 = vadd.f32 %v338, %v595
      %v597 = vpop.f32.mrb[0].mxu0
      %v598 = vadd.f32 %v334, %v597
      %v599 = vpop.f32.mrb[0].mxu0
      %v600 = vadd.f32 %v338, %v599
      %601 = vmatprep.mubr.bf16.mxu0 0
      %602 = vmatmul.mubr.bf16.gmra.mrb[0].mxu0 %v384
      %v603 = vpop.f32.mrb[0].mxu0
      %v604 = vadd.f32 %v334, %v603
      %v605 = vpop.f32.mrb[0].mxu0
      %v606 = vadd.f32 %v338, %v605
      %v607 = vpop.f32.mrb[0].mxu0
      %v608 = vadd.f32 %v334, %v607
      %v609 = vpop.f32.mrb[0].mxu0
      %v610 = vadd.f32 %v338, %v609
      %611 = vmatprep.mubr.bf16.mxu0 0
      %612 = vmatmul.mubr.bf16.gmra.mrb[0].mxu0 %v385
      %v613 = vpop.f32.mrb[0].mxu0
      %v614 = vadd.f32 %v334, %v613
      %v615 = vpop.f32.mrb[0].mxu0
      %v616 = vadd.f32 %v338, %v615
      %v617 = vpop.f32.mrb[0].mxu0
      %v618 = vadd.f32 %v334, %v617
      %v619 = vpop.f32.mrb[0].mxu0
      %v620 = vadd.f32 %v338, %v619
      %621 = vmatprep.mubr.bf16.mxu0 0
      %622 = vmatmul.mubr.bf16.gmra.mrb[0].mxu0 %v386
      %v623 = vpop.f32.mrb[0].mxu0
      %v624 = vadd.f32 %v334, %v623
      %v625 = vpop.f32.mrb[0].mxu0
      %v626 = vadd.f32 %v338, %v625
      %v627 = vpop.f32.mrb[0].mxu0
      %v628 = vadd.f32 %v334, %v627
      %v629 = vpop.f32.mrb[0].mxu0
      %v630 = vadd.f32 %v338, %v629
      %631 = vmatprep.mubr.bf16.mxu0 0
      %632 = vmatmul.mubr.bf16.gmra.mrb[0].mxu0 %v387
      %v633 = vpop.f32.mrb[0].mxu0
      %v634 = vadd.f32 %v334, %v633
      %v635 = vpop.f32.mrb[0].mxu0
      %v636 = vadd.f32 %v338, %v635
      %v637 = vpop.f32.mrb[0].mxu0
      %v638 = vadd.f32 %v334, %v637
      %v639 = vpop.f32.mrb[0].mxu0
      %v640 = vadd.f32 %v338, %v639
      %641 = vmatprep.mubr.bf16.mxu0 0
      %642 = vmatmul.mubr.bf16.gmra.mrb[0].mxu0 %v388
      %v643 = vpop.f32.mrb[0].mxu0
      %v644 = vadd.f32 %v334, %v643
      %v645 = vpop.f32.mrb[0].mxu0
      %v646 = vadd.f32 %v338, %v645
      %v647 = vpop.f32.mrb[0].mxu0
      %v648 = vadd.f32 %v334, %v647
      %v649 = vpop.f32.mrb[0].mxu0
      %v650 = vadd.f32 %v338, %v649
      %651 = vmatprep.mubr.bf16.mxu0 0
      %652 = vmatmul.mubr.bf16.gmra.mrb[0].mxu0 %v389
      %v653 = vpop.f32.mrb[0].mxu0
      %v654 = vadd.f32 %v334, %v653
      %v655 = vpop.f32.mrb[0].mxu0
      %v656 = vadd.f32 %v338, %v655
      %v657 = vpop.f32.mrb[0].mxu0
      %v658 = vadd.f32 %v334, %v657
      %v659 = vpop.f32.mrb[0].mxu0
      %v660 = vadd.f32 %v338, %v659
      %661 = vmatprep.mubr.bf16.mxu0 0
      %662 = vmatmul.mubr.bf16.gmra.mrb[0].mxu0 %v390
      %v663 = vpop.f32.mrb[0].mxu0
      %v664 = vadd.f32 %v334, %v663
      %v665 = vpop.f32.mrb[0].mxu0
      %v666 = vadd.f32 %v338, %v665
      %v667 = vpop.f32.mrb[0].mxu0
      %v668 = vadd.f32 %v334, %v667
      %v669 = vpop.f32.mrb[0].mxu0
      %v670 = vadd.f32 %v338, %v669
      %671 = vdwg.mxu0
      %672 = vmatprep.subr.bf16.mxu0 %v498
      %673 = vmatpush1.bf16.msra.mxu0 %v497
      %674 = vmatprep.subr.bf16.mxu0 %v502
      %675 = vmatpush1.bf16.msra.mxu0 %v501
      %676 = vmatprep.subr.bf16.mxu0 %v506
      %677 = vmatpush1.bf16.msra.mxu0 %v505
      %678 = vmatprep.subr.bf16.mxu0 %v510
      %679 = vmatpush1.bf16.msra.mxu0 %v509
      %680 = vmatprep.subr.bf16.mxu0 %v514
      %681 = vmatpush1.bf16.msra.mxu0 %v513
      %682 = vmatprep.subr.bf16.mxu0 %v518
      %683 = vmatpush1.bf16.msra.mxu0 %v517
      %684 = vmatprep.subr.bf16.mxu0 %v522
      %685 = vmatpush1.bf16.msra.mxu0 %v521
      %686 = vmatprep.subr.bf16.mxu0 %v526
      %687 = vmatpush1.bf16.msra.mxu0 %v525
      %688 = vmatprep.subr.bf16.mxu0 0
      %689 = vmatpush1.bf16.msra.mxu0 0
      %690 = vmatprep.subr.bf16.mxu0 0
      %691 = vmatpush1.bf16.msra.mxu0 0
      %692 = vmatprep.subr.bf16.mxu0 0
      %693 = vmatpush1.bf16.msra.mxu0 0
      %694 = vmatprep.subr.bf16.mxu0 0
      %695 = vmatpush1.bf16.msra.mxu0 0
      %696 = vmatprep.subr.bf16.mxu0 0
      %697 = vmatpush1.bf16.msra.mxu0 0
      %698 = vmatprep.subr.bf16.mxu0 0
      %699 = vmatpush1.bf16.msra.mxu0 0
      %700 = vmatprep.subr.bf16.mxu0 0
      %701 = vmatpush1.bf16.msra.mxu0 0
      %702 = vmatprep.subr.bf16.mxu0 0
      %703 = vmatpush1.bf16.msra.mxu0 0
      %704 = vmatprep.mubr.bf16.mxu0 0
      %705 = vmatmul.mubr.bf16.gmra.mrb[0].mxu0 %v383
      %v706 = vpop.f32.mrb[0].mxu0
      %v707 = vadd.f32 %v342, %v706
      %v708 = vpop.f32.mrb[0].mxu0
      %v709 = vadd.f32 %v346, %v708
      %v710 = vpop.f32.mrb[0].mxu0
      %v711 = vadd.f32 %v342, %v710
      %v712 = vpop.f32.mrb[0].mxu0
      %v713 = vadd.f32 %v346, %v712
      %714 = vmatprep.mubr.bf16.mxu0 0
      %715 = vmatmul.mubr.bf16.gmra.mrb[0].mxu0 %v384
      %v716 = vpop.f32.mrb[0].mxu0
      %v717 = vadd.f32 %v342, %v716
      %v718 = vpop.f32.mrb[0].mxu0
      %v719 = vadd.f32 %v346, %v718
      %v720 = vpop.f32.mrb[0].mxu0
      %v721 = vadd.f32 %v342, %v720
      %v722 = vpop.f32.mrb[0].mxu0
      %v723 = vadd.f32 %v346, %v722
      %724 = vmatprep.mubr.bf16.mxu0 0
      %725 = vmatmul.mubr.bf16.gmra.mrb[0].mxu0 %v385
      %v726 = vpop.f32.mrb[0].mxu0
      %v727 = vadd.f32 %v342, %v726
      %v728 = vpop.f32.mrb[0].mxu0
      %v729 = vadd.f32 %v346, %v728
      %v730 = vpop.f32.mrb[0].mxu0
      %v731 = vadd.f32 %v342, %v730
      %v732 = vpop.f32.mrb[0].mxu0
      %v733 = vadd.f32 %v346, %v732
      %734 = vmatprep.mubr.bf16.mxu0 0
      %735 = vmatmul.mubr.bf16.gmra.mrb[0].mxu0 %v386
      %v736 = vpop.f32.mrb[0].mxu0
      %v737 = vadd.f32 %v342, %v736
      %v738 = vpop.f32.mrb[0].mxu0
      %v739 = vadd.f32 %v346, %v738
      %v740 = vpop.f32.mrb[0].mxu0
      %v741 = vadd.f32 %v342, %v740
      %v742 = vpop.f32.mrb[0].mxu0
      %v743 = vadd.f32 %v346, %v742
      %744 = vmatprep.mubr.bf16.mxu0 0
      %745 = vmatmul.mubr.bf16.gmra.mrb[0].mxu0 %v387
      %v746 = vpop.f32.mrb[0].mxu0
      %v747 = vadd.f32 %v342, %v746
      %v748 = vpop.f32.mrb[0].mxu0
      %v749 = vadd.f32 %v346, %v748
      %v750 = vpop.f32.mrb[0].mxu0
      %v751 = vadd.f32 %v342, %v750
      %v752 = vpop.f32.mrb[0].mxu0
      %v753 = vadd.f32 %v346, %v752
      %754 = vmatprep.mubr.bf16.mxu0 0
      %755 = vmatmul.mubr.bf16.gmra.mrb[0].mxu0 %v388
      %v756 = vpop.f32.mrb[0].mxu0
      %v757 = vadd.f32 %v342, %v756
      %v758 = vpop.f32.mrb[0].mxu0
      %v759 = vadd.f32 %v346, %v758
      %v760 = vpop.f32.mrb[0].mxu0
      %v761 = vadd.f32 %v342, %v760
      %v762 = vpop.f32.mrb[0].mxu0
      %v763 = vadd.f32 %v346, %v762
      %764 = vmatprep.mubr.bf16.mxu0 0
      %765 = vmatmul.mubr.bf16.gmra.mrb[0].mxu0 %v389
      %v766 = vpop.f32.mrb[0].mxu0
      %v767 = vadd.f32 %v342, %v766
      %v768 = vpop.f32.mrb[0].mxu0
      %v769 = vadd.f32 %v346, %v768
      %v770 = vpop.f32.mrb[0].mxu0
      %v771 = vadd.f32 %v342, %v770
      %v772 = vpop.f32.mrb[0].mxu0
      %v773 = vadd.f32 %v346, %v772
      %774 = vmatprep.mubr.bf16.mxu0 0
      %775 = vmatmul.mubr.bf16.gmra.mrb[0].mxu0 %v390
      %v776 = vpop.f32.mrb[0].mxu0
      %v777 = vadd.f32 %v342, %v776
      %v778 = vpop.f32.mrb[0].mxu0
      %v779 = vadd.f32 %v346, %v778
      %v780 = vpop.f32.mrb[0].mxu0
      %v781 = vadd.f32 %v342, %v780
      %v782 = vpop.f32.mrb[0].mxu0
      %v783 = vadd.f32 %v346, %v782
      %784 = vdwg.mxu0
      %v785 = vmax.f32 %v594, 0.0
      %v786 = vmax.f32 %v596, 0.0
      %v787 = vmax.f32 %v707, 0.0
      %v788 = vmax.f32 %v709, 0.0
      %v789 = vmax.f32 %v598, 0.0
      %v790 = vmax.f32 %v600, 0.0
      %v791 = vmax.f32 %v711, 0.0
      %v792 = vmax.f32 %v713, 0.0
      %v793 = vmax.f32 %v604, 0.0
      %v794 = vmax.f32 %v606, 0.0
      %v795 = vmax.f32 %v717, 0.0
      %v796 = vmax.f32 %v719, 0.0
      %v797 = vmax.f32 %v608, 0.0
      %v798 = vmax.f32 %v610, 0.0
      %v799 = vmax.f32 %v721, 0.0
      %v800 = vmax.f32 %v723, 0.0
      %v801 = vmax.f32 %v614, 0.0
      %v802 = vmax.f32 %v616, 0.0
      %v803 = vmax.f32 %v727, 0.0
      %v804 = vmax.f32 %v729, 0.0
      %v805 = vmax.f32 %v618, 0.0
      %v806 = vmax.f32 %v620, 0.0
      %v807 = vmax.f32 %v731, 0.0
      %v808 = vmax.f32 %v733, 0.0
      %v809 = vmax.f32 %v624, 0.0
      %v810 = vmax.f32 %v626, 0.0
      %v811 = vmax.f32 %v737, 0.0
      %v812 = vmax.f32 %v739, 0.0
      %v813 = vmax.f32 %v628, 0.0
      %v814 = vmax.f32 %v630, 0.0
      %v815 = vmax.f32 %v741, 0.0
      %v816 = vmax.f32 %v743, 0.0
      %v817 = vmax.f32 %v634, 0.0
      %v818 = vmax.f32 %v636, 0.0
      %v819 = vmax.f32 %v747, 0.0
      %v820 = vmax.f32 %v749, 0.0
      %v821 = vmax.f32 %v638, 0.0
      %v822 = vmax.f32 %v640, 0.0
      %v823 = vmax.f32 %v751, 0.0
      %v824 = vmax.f32 %v753, 0.0
      %v825 = vmax.f32 %v644, 0.0
      %v826 = vmax.f32 %v646, 0.0
      %v827 = vmax.f32 %v757, 0.0
      %v828 = vmax.f32 %v759, 0.0
      %v829 = vmax.f32 %v648, 0.0
      %v830 = vmax.f32 %v650, 0.0
      %v831 = vmax.f32 %v761, 0.0
      %v832 = vmax.f32 %v763, 0.0
      %v833 = vmax.f32 %v654, 0.0
      %v834 = vmax.f32 %v656, 0.0
      %v835 = vmax.f32 %v767, 0.0
      %v836 = vmax.f32 %v769, 0.0
      %v837 = vmax.f32 %v658, 0.0
      %v838 = vmax.f32 %v660, 0.0
      %v839 = vmax.f32 %v771, 0.0
      %v840 = vmax.f32 %v773, 0.0
      %v841 = vmax.f32 %v664, 0.0
      %v842 = vmax.f32 %v666, 0.0
      %v843 = vmax.f32 %v777, 0.0
      %v844 = vmax.f32 %v779, 0.0
      %v845 = vmax.f32 %v668, 0.0
      %v846 = vmax.f32 %v670, 0.0
      %v847 = vmax.f32 %v781, 0.0
      %v848 = vmax.f32 %v783, 0.0
      %s849 = smul.u32 %s22, 128
      %v850 = vpack.c.bf16 %v789, %v785
      %v851 = vpack.c.bf16 %v790, %v786
      %v852 = vpack.c.bf16 %v791, %v787
      %v853 = vpack.c.bf16 %v792, %v788
      %v854 = vpack.c.bf16 %v797, %v793
      %v855 = vpack.c.bf16 %v798, %v794
      %v856 = vpack.c.bf16 %v799, %v795
      %v857 = vpack.c.bf16 %v800, %v796
      %v858 = vpack.c.bf16 %v805, %v801
      %v859 = vpack.c.bf16 %v806, %v802
      %v860 = vpack.c.bf16 %v807, %v803
      %v861 = vpack.c.bf16 %v808, %v804
      %v862 = vpack.c.bf16 %v813, %v809
      %v863 = vpack.c.bf16 %v814, %v810
      %v864 = vpack.c.bf16 %v815, %v811
      %v865 = vpack.c.bf16 %v816, %v812
      %v866 = vpack.c.bf16 %v821, %v817
      %v867 = vpack.c.bf16 %v822, %v818
      %v868 = vpack.c.bf16 %v823, %v819
      %v869 = vpack.c.bf16 %v824, %v820
      %v870 = vpack.c.bf16 %v829, %v825
      %v871 = vpack.c.bf16 %v830, %v826
      %v872 = vpack.c.bf16 %v831, %v827
      %v873 = vpack.c.bf16 %v832, %v828
      %v874 = vpack.c.bf16 %v837, %v833
      %v875 = vpack.c.bf16 %v838, %v834
      %v876 = vpack.c.bf16 %v839, %v835
      %v877 = vpack.c.bf16 %v840, %v836
      %v878 = vpack.c.bf16 %v845, %v841
      %v879 = vpack.c.bf16 %v846, %v842
      %v880 = vpack.c.bf16 %v847, %v843
      %v881 = vpack.c.bf16 %v848, %v844
      %s882 = sshra.s32 %s849, 4
      %s883 = sand.u32 %s849, 15
      %s884 = smul.u32 %s882, 4
      %s885 = smul.addr %s884, 8
      %s886 = scalar_lea.vmem [#allocation2], %s885
      %887 = vst [vmem:[%s886] sm:$0xff] %v850
      %888 = vst [vmem:[%s886 + $0x8] sm:$0xff] %v851
      %889 = vst [vmem:[%s886 + $0x10] sm:$0xff] %v852
      %890 = vst [vmem:[%s886 + $0x18] sm:$0xff] %v853
      %891 = vst [vmem:[%s886 + $0x20] sm:$0xff] %v854
      %892 = vst [vmem:[%s886 + $0x28] sm:$0xff] %v855
      %893 = vst [vmem:[%s886 + $0x30] sm:$0xff] %v856
      %894 = vst [vmem:[%s886 + $0x38] sm:$0xff] %v857
      %895 = vst [vmem:[%s886 + $0x40] sm:$0xff] %v858
      %896 = vst [vmem:[%s886 + $0x48] sm:$0xff] %v859
      %897 = vst [vmem:[%s886 + $0x50] sm:$0xff] %v860
      %898 = vst [vmem:[%s886 + $0x58] sm:$0xff] %v861
      %899 = vst [vmem:[%s886 + $0x60] sm:$0xff] %v862
      %900 = vst [vmem:[%s886 + $0x68] sm:$0xff] %v863
      %901 = vst [vmem:[%s886 + $0x70] sm:$0xff] %v864
      %902 = vst [vmem:[%s886 + $0x78] sm:$0xff] %v865
      %903 = vst [vmem:[%s886 + $0x80] sm:$0xff] %v866
      %904 = vst [vmem:[%s886 + $0x88] sm:$0xff] %v867
      %905 = vst [vmem:[%s886 + $0x90] sm:$0xff] %v868
      %906 = vst [vmem:[%s886 + $0x98] sm:$0xff] %v869
      %907 = vst [vmem:[%s886 + $0xa0] sm:$0xff] %v870
      %908 = vst [vmem:[%s886 + $0xa8] sm:$0xff] %v871
      %909 = vst [vmem:[%s886 + $0xb0] sm:$0xff] %v872
      %910 = vst [vmem:[%s886 + $0xb8] sm:$0xff] %v873
      %911 = vst [vmem:[%s886 + $0xc0] sm:$0xff] %v874
      %912 = vst [vmem:[%s886 + $0xc8] sm:$0xff] %v875
      %913 = vst [vmem:[%s886 + $0xd0] sm:$0xff] %v876
      %914 = vst [vmem:[%s886 + $0xd8] sm:$0xff] %v877
      %915 = vst [vmem:[%s886 + $0xe0] sm:$0xff] %v878
      %916 = vst [vmem:[%s886 + $0xe8] sm:$0xff] %v879
      %917 = vst [vmem:[%s886 + $0xf0] sm:$0xff] %v880
      %918 = vst [vmem:[%s886 + $0xf8] sm:$0xff] %v881
      %p919 = scmp.eq.s32.totalorder %s22, 1
      // Predicated region
      $region45: #{ronet_forward.1} parent=43 // pred_check
        %p920 = pneg %p919
      $region46: #{ronet_forward.1} parent=43 // pred_check_branch
        %922 = sbr.rel (%p920) target = $region48
      $region47: #{ronet_forward.1} parent=43 // pred_region
        %v923 = vld [vmem:[#allocation2] sm:$0xff]
        %v924 = vld [vmem:[#allocation2 + $0x8] sm:$0xff]
        %v925 = vld [vmem:[#allocation2 + $0x10] sm:$0xff]
        %v926 = vld [vmem:[#allocation2 + $0x18] sm:$0xff]
        %v927 = vld [vmem:[#allocation2 + $0x20] sm:$0xff]
        %v928 = vld [vmem:[#allocation2 + $0x28] sm:$0xff]
        %v929 = vld [vmem:[#allocation2 + $0x30] sm:$0xff]
        %v930 = vld [vmem:[#allocation2 + $0x38] sm:$0xff]
        %v931 = vld [vmem:[#allocation2 + $0x40] sm:$0xff]
        %v932 = vld [vmem:[#allocation2 + $0x48] sm:$0xff]
        %v933 = vld [vmem:[#allocation2 + $0x50] sm:$0xff]
        %v934 = vld [vmem:[#allocation2 + $0x58] sm:$0xff]
        %v935 = vld [vmem:[#allocation2 + $0x60] sm:$0xff]
        %v936 = vld [vmem:[#allocation2 + $0x68] sm:$0xff]
        %v937 = vld [vmem:[#allocation2 + $0x70] sm:$0xff]
        %v938 = vld [vmem:[#allocation2 + $0x78] sm:$0xff]
        %v939 = vld [vmem:[#allocation2 + $0x80] sm:$0xff]
        %v940 = vld [vmem:[#allocation2 + $0x88] sm:$0xff]
        %v941 = vld [vmem:[#allocation2 + $0x90] sm:$0xff]
        %v942 = vld [vmem:[#allocation2 + $0x98] sm:$0xff]
        %v943 = vld [vmem:[#allocation2 + $0xa0] sm:$0xff]
        %v944 = vld [vmem:[#allocation2 + $0xa8] sm:$0xff]
        %v945 = vld [vmem:[#allocation2 + $0xb0] sm:$0xff]
        %v946 = vld [vmem:[#allocation2 + $0xb8] sm:$0xff]
        %v947 = vld [vmem:[#allocation2 + $0xc0] sm:$0xff]
        %v948 = vld [vmem:[#allocation2 + $0xc8] sm:$0xff]
        %v949 = vld [vmem:[#allocation2 + $0xd0] sm:$0xff]
        %v950 = vld [vmem:[#allocation2 + $0xd8] sm:$0xff]
        %v951 = vld [vmem:[#allocation2 + $0xe0] sm:$0xff]
        %v952 = vld [vmem:[#allocation2 + $0xe8] sm:$0xff]
        %v953 = vld [vmem:[#allocation2 + $0xf0] sm:$0xff]
        %v954 = vld [vmem:[#allocation2 + $0xf8] sm:$0xff]
        %v955 = vld [vmem:[#allocation2 + $0x100] sm:$0xff]
        %v956 = vld [vmem:[#allocation2 + $0x108] sm:$0xff]
        %v957 = vld [vmem:[#allocation2 + $0x110] sm:$0xff]
        %v958 = vld [vmem:[#allocation2 + $0x118] sm:$0xff]
        %v959 = vld [vmem:[#allocation2 + $0x120] sm:$0xff]
        %v960 = vld [vmem:[#allocation2 + $0x128] sm:$0xff]
        %v961 = vld [vmem:[#allocation2 + $0x130] sm:$0xff]
        %v962 = vld [vmem:[#allocation2 + $0x138] sm:$0xff]
        %v963 = vld [vmem:[#allocation2 + $0x140] sm:$0xff]
        %v964 = vld [vmem:[#allocation2 + $0x148] sm:$0xff]
        %v965 = vld [vmem:[#allocation2 + $0x150] sm:$0xff]
        %v966 = vld [vmem:[#allocation2 + $0x158] sm:$0xff]
        %v967 = vld [vmem:[#allocation2 + $0x160] sm:$0xff]
        %v968 = vld [vmem:[#allocation2 + $0x168] sm:$0xff]
        %v969 = vld [vmem:[#allocation2 + $0x170] sm:$0xff]
        %v970 = vld [vmem:[#allocation2 + $0x178] sm:$0xff]
        %v971 = vld [vmem:[#allocation2 + $0x180] sm:$0xff]
        %v972 = vld [vmem:[#allocation2 + $0x188] sm:$0xff]
        %v973 = vld [vmem:[#allocation2 + $0x190] sm:$0xff]
        %v974 = vld [vmem:[#allocation2 + $0x198] sm:$0xff]
        %v975 = vld [vmem:[#allocation2 + $0x1a0] sm:$0xff]
        %v976 = vld [vmem:[#allocation2 + $0x1a8] sm:$0xff]
        %v977 = vld [vmem:[#allocation2 + $0x1b0] sm:$0xff]
        %v978 = vld [vmem:[#allocation2 + $0x1b8] sm:$0xff]
        %v979 = vld [vmem:[#allocation2 + $0x1c0] sm:$0xff]
        %v980 = vld [vmem:[#allocation2 + $0x1c8] sm:$0xff]
        %v981 = vld [vmem:[#allocation2 + $0x1d0] sm:$0xff]
        %v982 = vld [vmem:[#allocation2 + $0x1d8] sm:$0xff]
        %v983 = vld [vmem:[#allocation2 + $0x1e0] sm:$0xff]
        %v984 = vld [vmem:[#allocation2 + $0x1e8] sm:$0xff]
        %v985 = vld [vmem:[#allocation2 + $0x1f0] sm:$0xff]
        %v986 = vld [vmem:[#allocation2 + $0x1f8] sm:$0xff]
        %v987 = vld [vmem:[%s3] sm:$0xff]
        %v988 = vld [vmem:[%s3 + $0x8] sm:$0xff]
        %v989 = vld [vmem:[%s3 + $0x10] sm:$0xff]
        %v990 = vld [vmem:[%s3 + $0x18] sm:$0xff]
        %v991 = vld [vmem:[%s3 + $0x20] sm:$0xff]
        %v992 = vld [vmem:[%s3 + $0x28] sm:$0xff]
        %v993 = vld [vmem:[%s3 + $0x30] sm:$0xff]
        %v994 = vld [vmem:[%s3 + $0x38] sm:$0xff]
        %v1003 = vunpack.c.l.b16 %v987
        %v1004 = vunpack.c.h.b16 %v987
        %v1005 = vunpack.c.l.b16 %v988
        %v1006 = vunpack.c.h.b16 %v988
        %v1007 = vunpack.c.l.b16 %v989
        %v1008 = vunpack.c.h.b16 %v989
        %v1009 = vunpack.c.l.b16 %v990
        %v1010 = vunpack.c.h.b16 %v990
        %v1011 = vunpack.c.l.b16 %v991
        %v1012 = vunpack.c.h.b16 %v991
        %v1013 = vunpack.c.l.b16 %v992
        %v1014 = vunpack.c.h.b16 %v992
        %v1015 = vunpack.c.l.b16 %v993
        %v1016 = vunpack.c.h.b16 %v993
        %v1017 = vunpack.c.l.b16 %v994
        %v1018 = vunpack.c.h.b16 %v994
        %v1019 = vpack.c.b16 %v1007, %v1003
        %v1020 = vpack.c.b16 %v1008, %v1004
        %v1021 = vpack.c.b16 %v1009, %v1005
        %v1022 = vpack.c.b16 %v1010, %v1006
        %v1023 = vpack.c.b16 %v1015, %v1011
        %v1024 = vpack.c.b16 %v1016, %v1012
        %v1025 = vpack.c.b16 %v1017, %v1013
        %v1026 = vpack.c.b16 %v1018, %v1014
        %1035 = vmatprep.subr.bf16.mxu0 %v924
        %1036 = vmatpush1.bf16.xpose.msra.mxu0 %v923
        %1037 = vmatprep.subr.bf16.mxu0 %v928
        %1038 = vmatpush1.bf16.xpose.msra.mxu0 %v927
        %1039 = vmatprep.subr.bf16.mxu0 %v932
        %1040 = vmatpush1.bf16.xpose.msra.mxu0 %v931
        %1041 = vmatprep.subr.bf16.mxu0 %v936
        %1042 = vmatpush1.bf16.xpose.msra.mxu0 %v935
        %1043 = vmatprep.subr.bf16.mxu0 %v940
        %1044 = vmatpush1.bf16.xpose.msra.mxu0 %v939
        %1045 = vmatprep.subr.bf16.mxu0 %v944
        %1046 = vmatpush1.bf16.xpose.msra.mxu0 %v943
        %1047 = vmatprep.subr.bf16.mxu0 %v948
        %1048 = vmatpush1.bf16.xpose.msra.mxu0 %v947
        %1049 = vmatprep.subr.bf16.mxu0 %v952
        %1050 = vmatpush1.bf16.xpose.msra.mxu0 %v951
        %1051 = vmatprep.subr.bf16.mxu0 %v956
        %1052 = vmatpush1.bf16.xpose.msra.mxu0 %v955
        %1053 = vmatprep.subr.bf16.mxu0 %v960
        %1054 = vmatpush1.bf16.xpose.msra.mxu0 %v959
        %1055 = vmatprep.subr.bf16.mxu0 %v964
        %1056 = vmatpush1.bf16.xpose.msra.mxu0 %v963
        %1057 = vmatprep.subr.bf16.mxu0 %v968
        %1058 = vmatpush1.bf16.xpose.msra.mxu0 %v967
        %1059 = vmatprep.subr.bf16.mxu0 %v972
        %1060 = vmatpush1.bf16.xpose.msra.mxu0 %v971
        %1061 = vmatprep.subr.bf16.mxu0 %v976
        %1062 = vmatpush1.bf16.xpose.msra.mxu0 %v975
        %1063 = vmatprep.subr.bf16.mxu0 %v980
        %1064 = vmatpush1.bf16.xpose.msra.mxu0 %v979
        %1065 = vmatprep.subr.bf16.mxu0 %v984
        %1066 = vmatpush1.bf16.xpose.msra.mxu0 %v983
        %1067 = vmatprep.mubr.bf16.mxu0 %v1020
        %1068 = vmatmul.mubr.bf16.gmra.mrb[0].mxu0 %v1019
        %v1069 = vpop.f32.mrb[0].mxu0
        %v1070 = vadd.f32 0.0, %v1069
        %v1071 = vpop.f32.mrb[0].mxu0
        %v1072 = vadd.f32 0.0, %v1071
        %v1073 = vpop.f32.mrb[0].mxu0
        %v1074 = vadd.f32 0.0, %v1073
        %v1075 = vpop.f32.mrb[0].mxu0
        %v1076 = vadd.f32 0.0, %v1075
        %1077 = vmatprep.mubr.bf16.mxu0 %v1024
        %1078 = vmatmul.mubr.bf16.gmra.mrb[0].mxu0 %v1023
        %v1079 = vpop.f32.mrb[0].mxu0
        %v1080 = vadd.f32 0.0, %v1079
        %v1081 = vpop.f32.mrb[0].mxu0
        %v1082 = vadd.f32 0.0, %v1081
        %v1083 = vpop.f32.mrb[0].mxu0
        %v1084 = vadd.f32 0.0, %v1083
        %v1085 = vpop.f32.mrb[0].mxu0
        %v1086 = vadd.f32 0.0, %v1085
        %1087 = vdwg.mxu0
        %1088 = vmatprep.subr.bf16.mxu0 %v926
        %1089 = vmatpush1.bf16.xpose.msra.mxu0 %v925
        %1090 = vmatprep.subr.bf16.mxu0 %v930
        %1091 = vmatpush1.bf16.xpose.msra.mxu0 %v929
        %1092 = vmatprep.subr.bf16.mxu0 %v934
        %1093 = vmatpush1.bf16.xpose.msra.mxu0 %v933
        %1094 = vmatprep.subr.bf16.mxu0 %v938
        %1095 = vmatpush1.bf16.xpose.msra.mxu0 %v937
        %1096 = vmatprep.subr.bf16.mxu0 %v942
        %1097 = vmatpush1.bf16.xpose.msra.mxu0 %v941
        %1098 = vmatprep.subr.bf16.mxu0 %v946
        %1099 = vmatpush1.bf16.xpose.msra.mxu0 %v945
        %1100 = vmatprep.subr.bf16.mxu0 %v950
        %1101 = vmatpush1.bf16.xpose.msra.mxu0 %v949
        %1102 = vmatprep.subr.bf16.mxu0 %v954
        %1103 = vmatpush1.bf16.xpose.msra.mxu0 %v953
        %1104 = vmatprep.subr.bf16.mxu0 %v958
        %1105 = vmatpush1.bf16.xpose.msra.mxu0 %v957
        %1106 = vmatprep.subr.bf16.mxu0 %v962
        %1107 = vmatpush1.bf16.xpose.msra.mxu0 %v961
        %1108 = vmatprep.subr.bf16.mxu0 %v966
        %1109 = vmatpush1.bf16.xpose.msra.mxu0 %v965
        %1110 = vmatprep.subr.bf16.mxu0 %v970
        %1111 = vmatpush1.bf16.xpose.msra.mxu0 %v969
        %1112 = vmatprep.subr.bf16.mxu0 %v974
        %1113 = vmatpush1.bf16.xpose.msra.mxu0 %v973
        %1114 = vmatprep.subr.bf16.mxu0 %v978
        %1115 = vmatpush1.bf16.xpose.msra.mxu0 %v977
        %1116 = vmatprep.subr.bf16.mxu0 %v982
        %1117 = vmatpush1.bf16.xpose.msra.mxu0 %v981
        %1118 = vmatprep.subr.bf16.mxu0 %v986
        %1119 = vmatpush1.bf16.xpose.msra.mxu0 %v985
        %1120 = vmatprep.mubr.bf16.mxu0 %v1022
        %1121 = vmatmul.mubr.bf16.gmra.mrb[0].mxu0 %v1021
        %v1122 = vpop.f32.mrb[0].mxu0
        %v1123 = vadd.f32 %v1070, %v1122
        %v1124 = vpop.f32.mrb[0].mxu0
        %v1125 = vadd.f32 %v1072, %v1124
        %v1126 = vpop.f32.mrb[0].mxu0
        %v1127 = vadd.f32 %v1074, %v1126
        %v1128 = vpop.f32.mrb[0].mxu0
        %v1129 = vadd.f32 %v1076, %v1128
        %1130 = vmatprep.mubr.bf16.mxu0 %v1026
        %1131 = vmatmul.mubr.bf16.gmra.mrb[0].mxu0 %v1025
        %v1132 = vpop.f32.mrb[0].mxu0
        %v1133 = vadd.f32 %v1080, %v1132
        %v1134 = vpop.f32.mrb[0].mxu0
        %v1135 = vadd.f32 %v1082, %v1134
        %v1136 = vpop.f32.mrb[0].mxu0
        %v1137 = vadd.f32 %v1084, %v1136
        %v1138 = vpop.f32.mrb[0].mxu0
        %v1139 = vadd.f32 %v1086, %v1138
        %1140 = vdwg.mxu0
        %v1141 = vmax.f32 %v1123, %v1125
        %1142 = vmax.xlane.f32.xlu0 %v1141
        %v1143 = vpop.xlane.xlu0 %1142
        %v1144 = vmax.f32 %v1127, %v1129
        %1145 = vmax.xlane.f32.xlu0 %v1144
        %v1146 = vpop.xlane.xlu0 %1145
        %v1147 = vmax.f32 %v1133, %v1135
        %1148 = vmax.xlane.f32.xlu0 %v1147
        %v1149 = vpop.xlane.xlu0 %1148
        %v1150 = vmax.f32 %v1137, %v1139
        %1151 = vmax.xlane.f32.xlu0 %v1150
        %v1152 = vpop.xlane.xlu0 %1151
        %v1153 = vsub.f32 %v1123, %v1143
        %v1154 = vsub.f32 %v1125, %v1143
        %v1155 = vsub.f32 %v1127, %v1146
        %v1156 = vsub.f32 %v1129, %v1146
        %v1157 = vsub.f32 %v1133, %v1149
        %v1158 = vsub.f32 %v1135, %v1149
        %v1159 = vsub.f32 %v1137, %v1152
        %v1160 = vsub.f32 %v1139, %v1152
        %v1161 = vmul.f32 %v1153, 1.442695
        %v1162 = vpow.pop %v1161
        %v1163 = vmul.f32 %v1154, 1.442695
        %v1164 = vpow.pop %v1163
        %v1165 = vmul.f32 %v1155, 1.442695
        %v1166 = vpow.pop %v1165
        %v1167 = vmul.f32 %v1156, 1.442695
        %v1168 = vpow.pop %v1167
        %v1169 = vmul.f32 %v1157, 1.442695
        %v1170 = vpow.pop %v1169
        %v1171 = vmul.f32 %v1158, 1.442695
        %v1172 = vpow.pop %v1171
        %v1173 = vmul.f32 %v1159, 1.442695
        %v1174 = vpow.pop %v1173
        %v1175 = vmul.f32 %v1160, 1.442695
        %v1176 = vpow.pop %v1175
        %v1177 = vadd.f32 %v1162, %v1164
        %1178 = vadd.xlane.f32.xlu0 %v1177
        %v1179 = vpop.xlane.xlu0 %1178
        %v1180 = vadd.f32 %v1166, %v1168
        %1181 = vadd.xlane.f32.xlu0 %v1180
        %v1182 = vpop.xlane.xlu0 %1181
        %v1183 = vadd.f32 %v1170, %v1172
        %1184 = vadd.xlane.f32.xlu0 %v1183
        %v1185 = vpop.xlane.xlu0 %1184
        %v1186 = vadd.f32 %v1174, %v1176
        %1187 = vadd.xlane.f32.xlu0 %v1186
        %v1188 = vpop.xlane.xlu0 %1187
        %v1189 = vrcp.pop %v1179
        %v1190 = vrcp.pop %v1182
        %v1191 = vrcp.pop %v1185
        %v1192 = vrcp.pop %v1188
        %v1193 = vmul.f32 %v1162, %v1189
        %v1194 = vmul.f32 %v1164, %v1189
        %v1195 = vmul.f32 %v1166, %v1190
        %v1196 = vmul.f32 %v1168, %v1190
        %v1197 = vmul.f32 %v1170, %v1191
        %v1198 = vmul.f32 %v1172, %v1191
        %v1199 = vmul.f32 %v1174, %v1192
        %v1200 = vmul.f32 %v1176, %v1192
        %v1201 = vpack.c.bf16 %v1195, %v1193
        %v1202 = vpack.c.bf16 %v1196, %v1194
        %v1203 = vpack.c.bf16 %v1199, %v1197
        %v1204 = vpack.c.bf16 %v1200, %v1198
        %1205 = vmatprep.subr.bf16.mxu0 %v924
        %1206 = vmatpush1.bf16.msra.mxu0 %v923
        %1207 = vmatprep.subr.bf16.mxu0 %v928
        %1208 = vmatpush1.bf16.msra.mxu0 %v927
        %1209 = vmatprep.subr.bf16.mxu0 %v932
        %1210 = vmatpush1.bf16.msra.mxu0 %v931
        %1211 = vmatprep.subr.bf16.mxu0 %v936
        %1212 = vmatpush1.bf16.msra.mxu0 %v935
        %1213 = vmatprep.subr.bf16.mxu0 %v940
        %1214 = vmatpush1.bf16.msra.mxu0 %v939
        %1215 = vmatprep.subr.bf16.mxu0 %v944
        %1216 = vmatpush1.bf16.msra.mxu0 %v943
        %1217 = vmatprep.subr.bf16.mxu0 %v948
        %1218 = vmatpush1.bf16.msra.mxu0 %v947
        %1219 = vmatprep.subr.bf16.mxu0 %v952
        %1220 = vmatpush1.bf16.msra.mxu0 %v951
        %1221 = vmatprep.subr.bf16.mxu0 %v956
        %1222 = vmatpush1.bf16.msra.mxu0 %v955
        %1223 = vmatprep.subr.bf16.mxu0 %v960
        %1224 = vmatpush1.bf16.msra.mxu0 %v959
        %1225 = vmatprep.subr.bf16.mxu0 %v964
        %1226 = vmatpush1.bf16.msra.mxu0 %v963
        %1227 = vmatprep.subr.bf16.mxu0 %v968
        %1228 = vmatpush1.bf16.msra.mxu0 %v967
        %1229 = vmatprep.subr.bf16.mxu0 %v972
        %1230 = vmatpush1.bf16.msra.mxu0 %v971
        %1231 = vmatprep.subr.bf16.mxu0 %v976
        %1232 = vmatpush1.bf16.msra.mxu0 %v975
        %1233 = vmatprep.subr.bf16.mxu0 %v980
        %1234 = vmatpush1.bf16.msra.mxu0 %v979
        %1235 = vmatprep.subr.bf16.mxu0 %v984
        %1236 = vmatpush1.bf16.msra.mxu0 %v983
        %1237 = vmatprep.mubr.bf16.mxu0 %v1202
        %1238 = vmatmul.mubr.bf16.gmra.mrb[0].mxu0 %v1201
        %v1239 = vpop.f32.mrb[0].mxu0
        %v1240 = vadd.f32 0.0, %v1239
        %v1241 = vpop.f32.mrb[0].mxu0
        %v1242 = vadd.f32 0.0, %v1241
        %v1243 = vpop.f32.mrb[0].mxu0
        %v1244 = vadd.f32 0.0, %v1243
        %v1245 = vpop.f32.mrb[0].mxu0
        %v1246 = vadd.f32 0.0, %v1245
        %1247 = vmatprep.mubr.bf16.mxu0 %v1204
        %1248 = vmatmul.mubr.bf16.gmra.mrb[0].mxu0 %v1203
        %v1249 = vpop.f32.mrb[0].mxu0
        %v1250 = vadd.f32 0.0, %v1249
        %v1251 = vpop.f32.mrb[0].mxu0
        %v1252 = vadd.f32 0.0, %v1251
        %v1253 = vpop.f32.mrb[0].mxu0
        %v1254 = vadd.f32 0.0, %v1253
        %v1255 = vpop.f32.mrb[0].mxu0
        %v1256 = vadd.f32 0.0, %v1255
        %1257 = vdwg.mxu0
        %1258 = vmatprep.subr.bf16.mxu0 %v926
        %1259 = vmatpush1.bf16.msra.mxu0 %v925
        %1260 = vmatprep.subr.bf16.mxu0 %v930
        %1261 = vmatpush1.bf16.msra.mxu0 %v929
        %1262 = vmatprep.subr.bf16.mxu0 %v934
        %1263 = vmatpush1.bf16.msra.mxu0 %v933
        %1264 = vmatprep.subr.bf16.mxu0 %v938
        %1265 = vmatpush1.bf16.msra.mxu0 %v937
        %1266 = vmatprep.subr.bf16.mxu0 %v942
        %1267 = vmatpush1.bf16.msra.mxu0 %v941
        %1268 = vmatprep.subr.bf16.mxu0 %v946
        %1269 = vmatpush1.bf16.msra.mxu0 %v945
        %1270 = vmatprep.subr.bf16.mxu0 %v950
        %1271 = vmatpush1.bf16.msra.mxu0 %v949
        %1272 = vmatprep.subr.bf16.mxu0 %v954
        %1273 = vmatpush1.bf16.msra.mxu0 %v953
        %1274 = vmatprep.subr.bf16.mxu0 %v958
        %1275 = vmatpush1.bf16.msra.mxu0 %v957
        %1276 = vmatprep.subr.bf16.mxu0 %v962
        %1277 = vmatpush1.bf16.msra.mxu0 %v961
        %1278 = vmatprep.subr.bf16.mxu0 %v966
        %1279 = vmatpush1.bf16.msra.mxu0 %v965
        %1280 = vmatprep.subr.bf16.mxu0 %v970
        %1281 = vmatpush1.bf16.msra.mxu0 %v969
        %1282 = vmatprep.subr.bf16.mxu0 %v974
        %1283 = vmatpush1.bf16.msra.mxu0 %v973
        %1284 = vmatprep.subr.bf16.mxu0 %v978
        %1285 = vmatpush1.bf16.msra.mxu0 %v977
        %1286 = vmatprep.subr.bf16.mxu0 %v982
        %1287 = vmatpush1.bf16.msra.mxu0 %v981
        %1288 = vmatprep.subr.bf16.mxu0 %v986
        %1289 = vmatpush1.bf16.msra.mxu0 %v985
        %1290 = vmatprep.mubr.bf16.mxu0 %v1202
        %1291 = vmatmul.mubr.bf16.gmra.mrb[0].mxu0 %v1201
        %v1292 = vpop.f32.mrb[0].mxu0
        %v1293 = vadd.f32 0.0, %v1292
        %v1294 = vpop.f32.mrb[0].mxu0
        %v1295 = vadd.f32 0.0, %v1294
        %v1296 = vpop.f32.mrb[0].mxu0
        %v1297 = vadd.f32 0.0, %v1296
        %v1298 = vpop.f32.mrb[0].mxu0
        %v1299 = vadd.f32 0.0, %v1298
        %1300 = vmatprep.mubr.bf16.mxu0 %v1204
        %1301 = vmatmul.mubr.bf16.gmra.mrb[0].mxu0 %v1203
        %v1302 = vpop.f32.mrb[0].mxu0
        %v1303 = vadd.f32 0.0, %v1302
        %v1304 = vpop.f32.mrb[0].mxu0
        %v1305 = vadd.f32 0.0, %v1304
        %v1306 = vpop.f32.mrb[0].mxu0
        %v1307 = vadd.f32 0.0, %v1306
        %v1308 = vpop.f32.mrb[0].mxu0
        %v1309 = vadd.f32 0.0, %v1308
        %1310 = vdwg.mxu0
        %v1311 = vpack.c.bf16 %v1244, %v1240
        %v1312 = vpack.c.bf16 %v1246, %v1242
        %v1313 = vpack.c.bf16 %v1297, %v1293
        %v1314 = vpack.c.bf16 %v1299, %v1295
        %v1315 = vpack.c.bf16 %v1254, %v1250
        %v1316 = vpack.c.bf16 %v1256, %v1252
        %v1317 = vpack.c.bf16 %v1307, %v1303
        %v1318 = vpack.c.bf16 %v1309, %v1305
        %v1319 = vld [vmem:[%s4] sm:$0xf]
        %v1320 = vld [vmem:[%s4 + $0x4] sm:$0xf]
        %v1321 = vld [vmem:[%s4 + $0x8] sm:$0xf]
        %v1322 = vld [vmem:[%s4 + $0xc] sm:$0xf]
        %v1323 = vld [vmem:[%s4 + $0x10] sm:$0xf]
        %v1324 = vld [vmem:[%s4 + $0x14] sm:$0xf]
        %v1325 = vld [vmem:[%s4 + $0x18] sm:$0xf]
        %v1326 = vld [vmem:[%s4 + $0x1c] sm:$0xf]
        %v1327 = vld [vmem:[%s4 + $0x20] sm:$0xf]
        %v1328 = vld [vmem:[%s4 + $0x24] sm:$0xf]
        %v1329 = vld [vmem:[%s4 + $0x28] sm:$0xf]
        %v1330 = vld [vmem:[%s4 + $0x2c] sm:$0xf]
        %v1331 = vld [vmem:[%s4 + $0x30] sm:$0xf]
        %v1332 = vld [vmem:[%s4 + $0x34] sm:$0xf]
        %v1333 = vld [vmem:[%s4 + $0x38] sm:$0xf]
        %v1334 = vld [vmem:[%s4 + $0x3c] sm:$0xf]
        %v1335 = vld [vmem:[%s4 + $0x40] sm:$0xf]
        %v1336 = vld [vmem:[%s4 + $0x44] sm:$0xf]
        %v1337 = vld [vmem:[%s4 + $0x48] sm:$0xf]
        %v1338 = vld [vmem:[%s4 + $0x4c] sm:$0xf]
        %v1339 = vld [vmem:[%s4 + $0x50] sm:$0xf]
        %v1340 = vld [vmem:[%s4 + $0x54] sm:$0xf]
        %v1341 = vld [vmem:[%s4 + $0x58] sm:$0xf]
        %v1342 = vld [vmem:[%s4 + $0x5c] sm:$0xf]
        %v1343 = vld [vmem:[%s4 + $0x60] sm:$0xf]
        %v1344 = vld [vmem:[%s4 + $0x64] sm:$0xf]
        %v1345 = vld [vmem:[%s4 + $0x68] sm:$0xf]
        %v1346 = vld [vmem:[%s4 + $0x6c] sm:$0xf]
        %v1347 = vld [vmem:[%s4 + $0x70] sm:$0xf]
        %v1348 = vld [vmem:[%s4 + $0x74] sm:$0xf]
        %v1349 = vld [vmem:[%s4 + $0x78] sm:$0xf]
        %v1350 = vld [vmem:[%s4 + $0x7c] sm:$0xf]
        %v1351 = vld [vmem:[%s4 + $0x80] sm:$0xf]
        %v1352 = vld [vmem:[%s4 + $0x84] sm:$0xf]
        %v1353 = vld [vmem:[%s4 + $0x88] sm:$0xf]
        %v1354 = vld [vmem:[%s4 + $0x8c] sm:$0xf]
        %v1355 = vld [vmem:[%s4 + $0x90] sm:$0xf]
        %v1356 = vld [vmem:[%s4 + $0x94] sm:$0xf]
        %v1357 = vld [vmem:[%s4 + $0x98] sm:$0xf]
        %v1358 = vld [vmem:[%s4 + $0x9c] sm:$0xf]
        %v1359 = vld [vmem:[%s4 + $0xa0] sm:$0xf]
        %v1360 = vld [vmem:[%s4 + $0xa4] sm:$0xf]
        %v1361 = vld [vmem:[%s4 + $0xa8] sm:$0xf]
        %v1362 = vld [vmem:[%s4 + $0xac] sm:$0xf]
        %v1363 = vld [vmem:[%s4 + $0xb0] sm:$0xf]
        %v1364 = vld [vmem:[%s4 + $0xb4] sm:$0xf]
        %v1365 = vld [vmem:[%s4 + $0xb8] sm:$0xf]
        %v1366 = vld [vmem:[%s4 + $0xbc] sm:$0xf]
        %v1367 = vld [vmem:[%s4 + $0xc0] sm:$0xf]
        %v1368 = vld [vmem:[%s4 + $0xc4] sm:$0xf]
        %v1369 = vld [vmem:[%s4 + $0xc8] sm:$0xf]
        %v1370 = vld [vmem:[%s4 + $0xcc] sm:$0xf]
        %v1371 = vld [vmem:[%s4 + $0xd0] sm:$0xf]
        %v1372 = vld [vmem:[%s4 + $0xd4] sm:$0xf]
        %v1373 = vld [vmem:[%s4 + $0xd8] sm:$0xf]
        %v1374 = vld [vmem:[%s4 + $0xdc] sm:$0xf]
        %v1375 = vld [vmem:[%s4 + $0xe0] sm:$0xf]
        %v1376 = vld [vmem:[%s4 + $0xe4] sm:$0xf]
        %v1377 = vld [vmem:[%s4 + $0xe8] sm:$0xf]
        %v1378 = vld [vmem:[%s4 + $0xec] sm:$0xf]
        %v1379 = vld [vmem:[%s4 + $0xf0] sm:$0xf]
        %v1380 = vld [vmem:[%s4 + $0xf4] sm:$0xf]
        %v1381 = vld [vmem:[%s4 + $0xf8] sm:$0xf]
        %v1382 = vld [vmem:[%s4 + $0xfc] sm:$0xf]
        %v1383 = vld [vmem:[%s5] sm:$0x1]
        %v1385 = vlaneseq
        %v1386 = vshrl.u32 %v1385, 7
        %v1387 = vsub.s32 0, %v1386
        %v1388 = vrot.slane %v1383, %v1387
        %v1454 = vunpack.c.l.b16 %v1319
        %v1455 = vunpack.c.l.b16 %v1320
        %v1456 = vunpack.c.l.b16 %v1321
        %v1457 = vunpack.c.l.b16 %v1322
        %v1458 = vunpack.c.l.b16 %v1323
        %v1459 = vunpack.c.l.b16 %v1324
        %v1460 = vunpack.c.l.b16 %v1325
        %v1461 = vunpack.c.l.b16 %v1326
        %v1462 = vunpack.c.l.b16 %v1327
        %v1463 = vunpack.c.l.b16 %v1328
        %v1464 = vunpack.c.l.b16 %v1329
        %v1465 = vunpack.c.l.b16 %v1330
        %v1466 = vunpack.c.l.b16 %v1331
        %v1467 = vunpack.c.l.b16 %v1332
        %v1468 = vunpack.c.l.b16 %v1333
        %v1469 = vunpack.c.l.b16 %v1334
        %v1470 = vunpack.c.l.b16 %v1335
        %v1471 = vunpack.c.l.b16 %v1336
        %v1472 = vunpack.c.l.b16 %v1337
        %v1473 = vunpack.c.l.b16 %v1338
        %v1474 = vunpack.c.l.b16 %v1339
        %v1475 = vunpack.c.l.b16 %v1340
        %v1476 = vunpack.c.l.b16 %v1341
        %v1477 = vunpack.c.l.b16 %v1342
        %v1478 = vunpack.c.l.b16 %v1343
        %v1479 = vunpack.c.l.b16 %v1344
        %v1480 = vunpack.c.l.b16 %v1345
        %v1481 = vunpack.c.l.b16 %v1346
        %v1482 = vunpack.c.l.b16 %v1347
        %v1483 = vunpack.c.l.b16 %v1348
        %v1484 = vunpack.c.l.b16 %v1349
        %v1485 = vunpack.c.l.b16 %v1350
        %v1486 = vunpack.c.l.b16 %v1351
        %v1487 = vunpack.c.l.b16 %v1352
        %v1488 = vunpack.c.l.b16 %v1353
        %v1489 = vunpack.c.l.b16 %v1354
        %v1490 = vunpack.c.l.b16 %v1355
        %v1491 = vunpack.c.l.b16 %v1356
        %v1492 = vunpack.c.l.b16 %v1357
        %v1493 = vunpack.c.l.b16 %v1358
        %v1494 = vunpack.c.l.b16 %v1359
        %v1495 = vunpack.c.l.b16 %v1360
        %v1496 = vunpack.c.l.b16 %v1361
        %v1497 = vunpack.c.l.b16 %v1362
        %v1498 = vunpack.c.l.b16 %v1363
        %v1499 = vunpack.c.l.b16 %v1364
        %v1500 = vunpack.c.l.b16 %v1365
        %v1501 = vunpack.c.l.b16 %v1366
        %v1502 = vunpack.c.l.b16 %v1367
        %v1503 = vunpack.c.l.b16 %v1368
        %v1504 = vunpack.c.l.b16 %v1369
        %v1505 = vunpack.c.l.b16 %v1370
        %v1506 = vunpack.c.l.b16 %v1371
        %v1507 = vunpack.c.l.b16 %v1372
        %v1508 = vunpack.c.l.b16 %v1373
        %v1509 = vunpack.c.l.b16 %v1374
        %v1510 = vunpack.c.l.b16 %v1375
        %v1511 = vunpack.c.l.b16 %v1376
        %v1512 = vunpack.c.l.b16 %v1377
        %v1513 = vunpack.c.l.b16 %v1378
        %v1514 = vunpack.c.l.b16 %v1379
        %v1515 = vunpack.c.l.b16 %v1380
        %v1516 = vunpack.c.l.b16 %v1381
        %v1517 = vunpack.c.l.b16 %v1382
        %v1518 = vpack.c.b16 %v1455, %v1454
        %v1519 = vpack.c.b16 %v1457, %v1456
        %v1520 = vpack.c.b16 %v1459, %v1458
        %v1521 = vpack.c.b16 %v1461, %v1460
        %v1522 = vpack.c.b16 %v1463, %v1462
        %v1523 = vpack.c.b16 %v1465, %v1464
        %v1524 = vpack.c.b16 %v1467, %v1466
        %v1525 = vpack.c.b16 %v1469, %v1468
        %v1526 = vpack.c.b16 %v1471, %v1470
        %v1527 = vpack.c.b16 %v1473, %v1472
        %v1528 = vpack.c.b16 %v1475, %v1474
        %v1529 = vpack.c.b16 %v1477, %v1476
        %v1530 = vpack.c.b16 %v1479, %v1478
        %v1531 = vpack.c.b16 %v1481, %v1480
        %v1532 = vpack.c.b16 %v1483, %v1482
        %v1533 = vpack.c.b16 %v1485, %v1484
        %v1534 = vpack.c.b16 %v1487, %v1486
        %v1535 = vpack.c.b16 %v1489, %v1488
        %v1536 = vpack.c.b16 %v1491, %v1490
        %v1537 = vpack.c.b16 %v1493, %v1492
        %v1538 = vpack.c.b16 %v1495, %v1494
        %v1539 = vpack.c.b16 %v1497, %v1496
        %v1540 = vpack.c.b16 %v1499, %v1498
        %v1541 = vpack.c.b16 %v1501, %v1500
        %v1542 = vpack.c.b16 %v1503, %v1502
        %v1543 = vpack.c.b16 %v1505, %v1504
        %v1544 = vpack.c.b16 %v1507, %v1506
        %v1545 = vpack.c.b16 %v1509, %v1508
        %v1546 = vpack.c.b16 %v1511, %v1510
        %v1547 = vpack.c.b16 %v1513, %v1512
        %v1548 = vpack.c.b16 %v1515, %v1514
        %v1549 = vpack.c.b16 %v1517, %v1516
        %1582 = vmatprep.subr.bf16.mxu0 0
        %1583 = vmatpush1.bf16.msra.mxu0 %v1518
        %1584 = vmatprep.subr.bf16.mxu0 0
        %1585 = vmatpush1.bf16.msra.mxu0 %v1519
        %1586 = vmatprep.subr.bf16.mxu0 0
        %1587 = vmatpush1.bf16.msra.mxu0 %v1520
        %1588 = vmatprep.subr.bf16.mxu0 0
        %1589 = vmatpush1.bf16.msra.mxu0 %v1521
        %1590 = vmatprep.subr.bf16.mxu0 0
        %1591 = vmatpush1.bf16.msra.mxu0 %v1522
        %1592 = vmatprep.subr.bf16.mxu0 0
        %1593 = vmatpush1.bf16.msra.mxu0 %v1523
        %1594 = vmatprep.subr.bf16.mxu0 0
        %1595 = vmatpush1.bf16.msra.mxu0 %v1524
        %1596 = vmatprep.subr.bf16.mxu0 0
        %1597 = vmatpush1.bf16.msra.mxu0 %v1525
        %1598 = vmatprep.subr.bf16.mxu0 0
        %1599 = vmatpush1.bf16.msra.mxu0 %v1526
        %1600 = vmatprep.subr.bf16.mxu0 0
        %1601 = vmatpush1.bf16.msra.mxu0 %v1527
        %1602 = vmatprep.subr.bf16.mxu0 0
        %1603 = vmatpush1.bf16.msra.mxu0 %v1528
        %1604 = vmatprep.subr.bf16.mxu0 0
        %1605 = vmatpush1.bf16.msra.mxu0 %v1529
        %1606 = vmatprep.subr.bf16.mxu0 0
        %1607 = vmatpush1.bf16.msra.mxu0 %v1530
        %1608 = vmatprep.subr.bf16.mxu0 0
        %1609 = vmatpush1.bf16.msra.mxu0 %v1531
        %1610 = vmatprep.subr.bf16.mxu0 0
        %1611 = vmatpush1.bf16.msra.mxu0 %v1532
        %1612 = vmatprep.subr.bf16.mxu0 0
        %1613 = vmatpush1.bf16.msra.mxu0 %v1533
        %1614 = vmatprep.mubr.bf16.mxu0 %v1312
        %1615 = vmatmul.mubr.bf16.gmra.mrb[0].mxu0 %v1311
        %v1616 = vpop.f32.mrb[0].mxu0
        %v1617 = vadd.f32 %v1388, %v1616
        %v1618 = vpop.f32.mrb[0].mxu0
        %v1619 = vpop.f32.mrb[0].mxu0
        %v1620 = vadd.f32 %v1388, %v1619
        %v1621 = vpop.f32.mrb[0].mxu0
        %1622 = vmatprep.mubr.bf16.mxu0 %v1316
        %1623 = vmatmul.mubr.bf16.gmra.mrb[0].mxu0 %v1315
        %v1624 = vpop.f32.mrb[0].mxu0
        %v1625 = vadd.f32 %v1388, %v1624
        %v1626 = vpop.f32.mrb[0].mxu0
        %v1627 = vpop.f32.mrb[0].mxu0
        %v1628 = vadd.f32 %v1388, %v1627
        %v1629 = vpop.f32.mrb[0].mxu0
        %1630 = vdwg.mxu0
        %1631 = vmatprep.subr.bf16.mxu0 0
        %1632 = vmatpush1.bf16.msra.mxu0 %v1534
        %1633 = vmatprep.subr.bf16.mxu0 0
        %1634 = vmatpush1.bf16.msra.mxu0 %v1535
        %1635 = vmatprep.subr.bf16.mxu0 0
        %1636 = vmatpush1.bf16.msra.mxu0 %v1536
        %1637 = vmatprep.subr.bf16.mxu0 0
        %1638 = vmatpush1.bf16.msra.mxu0 %v1537
        %1639 = vmatprep.subr.bf16.mxu0 0
        %1640 = vmatpush1.bf16.msra.mxu0 %v1538
        %1641 = vmatprep.subr.bf16.mxu0 0
        %1642 = vmatpush1.bf16.msra.mxu0 %v1539
        %1643 = vmatprep.subr.bf16.mxu0 0
        %1644 = vmatpush1.bf16.msra.mxu0 %v1540
        %1645 = vmatprep.subr.bf16.mxu0 0
        %1646 = vmatpush1.bf16.msra.mxu0 %v1541
        %1647 = vmatprep.subr.bf16.mxu0 0
        %1648 = vmatpush1.bf16.msra.mxu0 %v1542
        %1649 = vmatprep.subr.bf16.mxu0 0
        %1650 = vmatpush1.bf16.msra.mxu0 %v1543
        %1651 = vmatprep.subr.bf16.mxu0 0
        %1652 = vmatpush1.bf16.msra.mxu0 %v1544
        %1653 = vmatprep.subr.bf16.mxu0 0
        %1654 = vmatpush1.bf16.msra.mxu0 %v1545
        %1655 = vmatprep.subr.bf16.mxu0 0
        %1656 = vmatpush1.bf16.msra.mxu0 %v1546
        %1657 = vmatprep.subr.bf16.mxu0 0
        %1658 = vmatpush1.bf16.msra.mxu0 %v1547
        %1659 = vmatprep.subr.bf16.mxu0 0
        %1660 = vmatpush1.bf16.msra.mxu0 %v1548
        %1661 = vmatprep.subr.bf16.mxu0 0
        %1662 = vmatpush1.bf16.msra.mxu0 %v1549
        %1663 = vmatprep.mubr.bf16.mxu0 %v1314
        %1664 = vmatmul.mubr.bf16.gmra.mrb[0].mxu0 %v1313
        %v1665 = vpop.f32.mrb[0].mxu0
        %v1666 = vadd.f32 %v1617, %v1665
        %v1667 = vpop.f32.mrb[0].mxu0
        %v1668 = vpop.f32.mrb[0].mxu0
        %v1669 = vadd.f32 %v1620, %v1668
        %v1670 = vpop.f32.mrb[0].mxu0
        %1671 = vmatprep.mubr.bf16.mxu0 %v1318
        %1672 = vmatmul.mubr.bf16.gmra.mrb[0].mxu0 %v1317
        %v1673 = vpop.f32.mrb[0].mxu0
        %v1674 = vadd.f32 %v1625, %v1673
        %v1675 = vpop.f32.mrb[0].mxu0
        %v1676 = vpop.f32.mrb[0].mxu0
        %v1677 = vadd.f32 %v1628, %v1676
        %v1678 = vpop.f32.mrb[0].mxu0
        %1679 = vdwg.mxu0
        %1680 = vmax.xlane.f32.xlu0 %v1666
        %v1681 = vpop.xlane.xlu0 %1680
        %1682 = vmax.xlane.f32.xlu0 %v1669
        %v1683 = vpop.xlane.xlu0 %1682
        %1684 = vmax.xlane.f32.xlu0 %v1674
        %v1685 = vpop.xlane.xlu0 %1684
        %1686 = vmax.xlane.f32.xlu0 %v1677
        %v1687 = vpop.xlane.xlu0 %1686
        %v1688 = vsub.f32 %v1666, %v1681
        %v1689 = vsub.f32 %v1669, %v1683
        %v1690 = vsub.f32 %v1674, %v1685
        %v1691 = vsub.f32 %v1677, %v1687
        %v1692 = vmul.f32 %v1688, 1.442695
        %v1693 = vpow.pop %v1692
        %v1694 = vmul.f32 %v1689, 1.442695
        %v1695 = vpow.pop %v1694
        %v1696 = vmul.f32 %v1690, 1.442695
        %v1697 = vpow.pop %v1696
        %v1698 = vmul.f32 %v1691, 1.442695
        %v1699 = vpow.pop %v1698
        %1700 = vadd.xlane.f32.xlu0 %v1693
        %v1701 = vpop.xlane.xlu0 %1700
        %1702 = vadd.xlane.f32.xlu0 %v1695
        %v1703 = vpop.xlane.xlu0 %1702
        %1704 = vadd.xlane.f32.xlu0 %v1697
        %v1705 = vpop.xlane.xlu0 %1704
        %1706 = vadd.xlane.f32.xlu0 %v1699
        %v1707 = vpop.xlane.xlu0 %1706
        %v1708 = vlog2.pop %v1701
        %v1709 = vmul.f32 %v1708, 0.6931472
        %v1710 = vlog2.pop %v1703
        %v1711 = vmul.f32 %v1710, 0.6931472
        %v1712 = vlog2.pop %v1705
        %v1713 = vmul.f32 %v1712, 0.6931472
        %v1714 = vlog2.pop %v1707
        %v1715 = vmul.f32 %v1714, 0.6931472
        %v1716 = vsub.f32 %v1688, %v1709
        %v1717 = vsub.f32 %v1689, %v1711
        %v1718 = vsub.f32 %v1690, %v1713
        %v1719 = vsub.f32 %v1691, %v1715
        %1720 = vst [vmem:[%s279] sm:$0xff] %v1716
        %1721 = vst [vmem:[%s279 + $0x8] sm:$0xff] %v1717
        %1722 = vst [vmem:[%s279 + $0x10] sm:$0xff] %v1718
        %1723 = vst [vmem:[%s279 + $0x18] sm:$0xff] %v1719
      $region48: #{ronet_forward.1} parent=43 // pred_fallthru
        _
      %p1724 = scmp.lt.s32.totalorder %s21, 1
      %s1725 = scalar_select %p1724, %s21, 1
      %s1726 = smul.addr %s1725, 4
      %s1727 = smul.addr %s1726, 8
      %s1728 = scalar_lea.vmem %s6, %s1727
      // Predicated region
      $region49: #{ronet_forward.1} parent=43 // pred_check
        %p1729 = pneg %p180
      $region50: #{ronet_forward.1} parent=43 // pred_check_branch
        %1731 = sbr.rel (%p1729) target = $region52
      $region51: #{ronet_forward.1} parent=43 // pred_region
        _
      $region52: #{ronet_forward.1} parent=43 // pred_fallthru
        _
    $region44: #{ronet_forward.1} parent=5 // pred_fallthru
      _
    %p1732 = scmp.le.s32.totalorder 2, %s12
    // Predicated region
    $region53: #{ronet_forward.1} parent=5 // pred_check
      %p1733 = pneg %p1732
    $region54: #{ronet_forward.1} parent=5 // pred_check_branch
      %1735 = sbr.rel (%p1733) target = $region56
    $region55: #{ronet_forward.1} parent=5 // pred_region
      %s1736 = ssub.s32 %s12, 2
      // Predicated region
      $region57: #{ronet_forward.1} parent=55 // pred_check
        %p1737 = pneg %p186
      $region58: #{ronet_forward.1} parent=55 // pred_check_branch
        %1739 = sbr.rel (%p1737) target = $region60
      $region59: #{ronet_forward.1} parent=55 // pred_region
        %p1740 = scmp.lt.s32.totalorder %s23, 1
        %s1741 = scalar_select %p1740, %s23, 1
        %s1742 = smul.addr %s1741, 4
        %s1743 = smul.addr %s1742, 8
        %s1744 = scalar_lea.vmem %s6, %s1743
      $region60: #{ronet_forward.1} parent=55 // pred_fallthru
        _
    $region56: #{ronet_forward.1} parent=5 // pred_fallthru
      _
  $region6: #{ronet_forward.1} parent=0 // loop_footer
    %s16 = sadd.s32 1, %s12
  $region7: #{ronet_forward.1} parent=0 // loop_footer_branch
    %11 = sbr.rel target = $region3
  $region8: #{ronet_forward.1} parent=0 // loop_exit
    _

</llo_original>
